<compile_context>
chip_gen: v5e
topology: v5e:2x2
jax: 0.10.0
libtpu: 0.0.40
codegen_flags: <defaults>
</compile_context>

<pallas_src>
import functools
import math

import jax
import jax.numpy as jnp
from jax.experimental import pallas as pl
from jax.experimental.pallas import tpu as pltpu

IN_DIM = 6
HIDDEN = 24
OUT_DIM = 96
LAYER_NUM = 4

_INV_SQRT2 = 1.0 / math.sqrt(2.0)


def _gelu_prescaled(y):
    # y = z / sqrt(2) (the 1/sqrt(2) is folded into the layer's W and b), so
    # GELU(z) = 0.5 * z * (1 + erf(z/sqrt(2))) = INV_SQRT2 * y * (1 + erf(y)).
    return (_INV_SQRT2 * y) * (1.0 + jax.lax.erf(y))


def branch_kernel(x_ref, w_in_ref, b_in_ref, w_h_ref, b_h_ref,
                  w_out_ref, b_out_ref, o_ref, *, chunk, n_chunks):
    # x_ref: (IN_DIM, tm)  rows on the 128-lane axis (weights pre-scaled by 1/sqrt2)
    # o_ref: (tm, OUT_DIM) rows on sublanes -> stored directly as (B*N, 96)
    for c in range(n_chunks):                    # static unroll; keeps per-chunk
        lo, hi = c * chunk, (c + 1) * chunk      # activations vreg-resident
        x = x_ref[:, lo:hi]                      # (IN_DIM, chunk)
        # IN layer on the MXU (K=6 is padded internally; MXU has plenty of slack).
        u = jnp.dot(w_in_ref[...], x, preferred_element_type=jnp.float32)
        u = _gelu_prescaled(u + b_in_ref[...])   # (HIDDEN, chunk), fully lane-dense
        # Hidden layers (static unroll over the 4 hidden Linears).
        for l in range(LAYER_NUM):
            u = jnp.dot(w_h_ref[l], u, preferred_element_type=jnp.float32)
            u = _gelu_prescaled(u + b_h_ref[l])  # bias (HIDDEN, 1) lane-broadcast
        # OUT layer: contract the feature axis of both operands so the result lands
        # rows-on-sublanes, (chunk, OUT_DIM) -> direct store, no wrapper transpose.
        v = jax.lax.dot_general(u, w_out_ref[...],
                                (((0,), (1,)), ((), ())),
                                preferred_element_type=jnp.float32)
        v = _gelu_prescaled(v + b_out_ref[...])  # (chunk, OUT_DIM)
        o_ref[lo:hi, :] = v.astype(o_ref.dtype)


def _round_up(a, m):
    return ((a + m - 1) // m) * m


@functools.partial(jax.jit, static_argnames=("tm_target", "min_steps"))
def branch_forward(x, params, tm_target=2048, min_steps=2):
    """x: (B, N, IN_DIM) float32 -> (B, N, OUT_DIM) float32."""
    B, N, D = x.shape
    assert D == IN_DIM
    M = B * N

    # Adaptive row tile: ~tm_target rows/step, but >= min_steps grid steps when
    # possible (v7x megacore) and a lane-aligned tile that bounds padding waste.
    M128 = _round_up(M, 128)
    n_steps = max(min_steps, pl.cdiv(M128, tm_target))
    tm = min(_round_up(pl.cdiv(M128, n_steps), 128), M128)
    n_blocks = pl.cdiv(M, tm)
    M_grid = n_blocks * tm
    # Inner lane-chunk size: keep (chunk, 96) / (24, chunk) intermediates in vregs.
    chunk = 256 if tm % 256 == 0 else 128
    n_chunks = tm // chunk

    # Fold GELU's 1/sqrt(2) into the (tiny, VMEM-resident) weights and biases.
    inv = jnp.float32(_INV_SQRT2)
    w_in = params["w_in"] * inv                         # (HIDDEN, IN_DIM)
    b_in = params["b_in"] * inv                         # (HIDDEN, 1)
    w_h = params["w_h"] * inv                           # (L, HIDDEN, HIDDEN)
    b_h = params["b_h"] * inv                           # (L, HIDDEN, 1)
    w_out = params["w_out"] * inv                       # (OUT_DIM, HIDDEN)
    b_out = (params["b_out"] * inv).reshape(1, OUT_DIM)

    # Rows on the lane axis; zero-pad so every *input* block is full. Padded
    # columns produce GELU(bias) garbage that never reaches the (unpadded) output
    # because the final partial output block is masked on writeback.
    x_t = x.reshape(M, D).T                             # (IN_DIM, M)
    if M_grid != M:
        x_t = jnp.pad(x_t, ((0, 0), (0, M_grid - M)))

    n_weight_bytes = 4 * sum(int(p.size)
                             for p in jax.tree_util.tree_leaves(params))
    cost = pl.CostEstimate(
        flops=2 * M_grid * (IN_DIM * HIDDEN
                            + LAYER_NUM * HIDDEN * HIDDEN
                            + HIDDEN * OUT_DIM),
        transcendentals=M_grid * ((LAYER_NUM + 1) * HIDDEN + OUT_DIM),
        bytes_accessed=4 * M_grid * (IN_DIM + OUT_DIM) + n_weight_bytes,
    )

    out = pl.pallas_call(
        functools.partial(branch_kernel, chunk=chunk, n_chunks=n_chunks),
        out_shape=jax.ShapeDtypeStruct((M, OUT_DIM), jnp.float32),
        grid_spec=pltpu.PrefetchScalarGridSpec(
            num_scalar_prefetch=0,
            grid=(n_blocks,),
            in_specs=[
                pl.BlockSpec((IN_DIM, tm), lambda i: (0, i)),
                pl.BlockSpec((HIDDEN, IN_DIM), lambda i: (0, 0)),
                pl.BlockSpec((HIDDEN, 1), lambda i: (0, 0)),
                pl.BlockSpec((LAYER_NUM, HIDDEN, HIDDEN), lambda i: (0, 0, 0)),
                pl.BlockSpec((LAYER_NUM, HIDDEN, 1), lambda i: (0, 0, 0)),
                pl.BlockSpec((OUT_DIM, HIDDEN), lambda i: (0, 0)),
                pl.BlockSpec((1, OUT_DIM), lambda i: (0, 0)),
            ],
            out_specs=pl.BlockSpec((tm, OUT_DIM), lambda i: (i, 0)),
        ),
        compiler_params=pltpu.CompilerParams(
            dimension_semantics=("parallel",),           # megacore sharding on v7x
            vmem_limit_bytes=32 * 1024 * 1024),          # explicit (v5e default 16MiB)
        cost_estimate=cost,
    )(x_t, w_in, b_in, w_h, b_h, w_out, b_out)

    # Output already lands as (M, OUT_DIM); reshape is free metadata.
    return out.reshape(B, N, OUT_DIM)


def init_params(key):
    """PyTorch nn.Linear-style uniform init, keeping the torch (out, in) layout."""
    ks = jax.random.split(key, 2 + 2 * LAYER_NUM + 2)

    def linear(kw, kb, fan_in, fan_out):
        bound = 1.0 / math.sqrt(fan_in)
        w = jax.random.uniform(kw, (fan_out, fan_in), jnp.float32, -bound, bound)
        b = jax.random.uniform(kb, (fan_out, 1), jnp.float32, -bound, bound)
        return w, b

    w_in, b_in = linear(ks[0], ks[1], IN_DIM, HIDDEN)
    w_hs, b_hs = [], []
    for l in range(LAYER_NUM):
        w, b = linear(ks[2 + 2 * l], ks[3 + 2 * l], HIDDEN, HIDDEN)
        w_hs.append(w)
        b_hs.append(b)
    w_out, b_out = linear(ks[-2], ks[-1], HIDDEN, OUT_DIM)
    return {
        "w_in": w_in, "b_in": b_in,
        "w_h": jnp.stack(w_hs, axis=0),      # (LAYER_NUM, HIDDEN, HIDDEN)
        "b_h": jnp.stack(b_hs, axis=0),      # (LAYER_NUM, HIDDEN, 1)
        "w_out": w_out, "b_out": b_out,
    }


def _reference(x, params):
    """Pure-JAX reference (torch-layout weights: y = x @ W^T + b)."""
    u = x @ params["w_in"].T + params["b_in"][:, 0]
    u = jax.nn.gelu(u, approximate=False)
    for l in range(LAYER_NUM):
        u = u @ params["w_h"][l].T + params["b_h"][l, :, 0]
        u = jax.nn.gelu(u, approximate=False)
    u = u @ params["w_out"].T + params["b_out"][:, 0]
    return jax.nn.gelu(u, approximate=False)


if __name__ == "__main__":
    key = jax.random.PRNGKey(0)
    kx, kp = jax.random.split(key)

    B, N = 2, 8                          # 16 rows; one 128-lane tile, masked store
    x = jax.random.normal(kx, (B, N, IN_DIM), dtype=jnp.float32)
    params = init_params(kp)

    out = jax.block_until_ready(branch_forward(x, params))
    ref = _reference(x, params)

    assert out.shape == (B, N, OUT_DIM)
    assert jnp.allclose(out, ref, atol=1e-4, rtol=1e-4), "mismatch vs reference"
    print("KERNEL_OK")
</pallas_src>

<mosaic_0001>
module attributes {stable_mosaic.version = 11 : i64} {
  func.func @branch_kernel(%arg0: i32, %arg1: memref<6x128xf32, #tpu.memory_space<vmem>>, %arg2: memref<24x6xf32, #tpu.memory_space<vmem>>, %arg3: memref<24x1xf32, #tpu.memory_space<vmem>>, %arg4: memref<4x24x24xf32, #tpu.memory_space<vmem>>, %arg5: memref<4x24x1xf32, #tpu.memory_space<vmem>>, %arg6: memref<96x24xf32, #tpu.memory_space<vmem>>, %arg7: memref<1x96xf32, #tpu.memory_space<vmem>>, %arg8: memref<128x96xf32, #tpu.memory_space<vmem>>) attributes {dimension_semantics = [#tpu.dimension_semantics<parallel>], iteration_bounds = array<i64: 1>, scalar_prefetch = 0 : i64, scratch_operands = 0 : i64, tpu.core_type = #tpu.core_type<tc>, window_params = [{transform_indices = @transform_0, window_bounds = array<i64: 6, 128>}, {pipeline_mode = #tpu.pipeline_mode<synchronous>, transform_indices = @transform_1, window_bounds = array<i64: 24, 6>}, {pipeline_mode = #tpu.pipeline_mode<synchronous>, transform_indices = @transform_2, window_bounds = array<i64: 24, 1>}, {pipeline_mode = #tpu.pipeline_mode<synchronous>, transform_indices = @transform_3, window_bounds = array<i64: 4, 24, 24>}, {pipeline_mode = #tpu.pipeline_mode<synchronous>, transform_indices = @transform_4, window_bounds = array<i64: 4, 24, 1>}, {pipeline_mode = #tpu.pipeline_mode<synchronous>, transform_indices = @transform_5, window_bounds = array<i64: 96, 24>}, {pipeline_mode = #tpu.pipeline_mode<synchronous>, transform_indices = @transform_6, window_bounds = array<i64: 1, 96>}, {transform_indices = @transform_7, window_bounds = array<i64: 128, 96>}]} {
    %c0 = arith.constant 0 : index
    %c0_0 = arith.constant 0 : index
    %0 = vector.load %arg1[%c0, %c0_0] : memref<6x128xf32, #tpu.memory_space<vmem>>, vector<6x128xf32>
    %c0_1 = arith.constant 0 : index
    %c0_2 = arith.constant 0 : index
    %1 = vector.load %arg2[%c0_1, %c0_2] : memref<24x6xf32, #tpu.memory_space<vmem>>, vector<24x6xf32>
    %cst = arith.constant dense<0.000000e+00> : vector<24x128xf32>
    %2 = tpu.matmul %1, %0, %cst {dimension_numbers = #tpu.dot_dimension_numbers<[1], [0], [0], [1], [0, 0, 1, 1], [], []>} : vector<24x6xf32>, vector<6x128xf32>, vector<24x128xf32> -> vector<24x128xf32>
    %c0_3 = arith.constant 0 : index
    %c0_4 = arith.constant 0 : index
    %3 = vector.load %arg3[%c0_3, %c0_4] : memref<24x1xf32, #tpu.memory_space<vmem>>, vector<24x1xf32>
    %4 = vector.broadcast %3 : vector<24x1xf32> to vector<24x128xf32>
    %5 = arith.addf %2, %4 : vector<24x128xf32>
    %cst_5 = arith.constant 0.707106769 : f32
    %6 = vector.broadcast %cst_5 : f32 to vector<24x128xf32>
    %7 = arith.mulf %6, %5 : vector<24x128xf32>
    %8 = math.erf %5 : vector<24x128xf32>
    %cst_6 = arith.constant 1.000000e+00 : f32
    %9 = vector.broadcast %cst_6 : f32 to vector<24x128xf32>
    %10 = arith.addf %9, %8 : vector<24x128xf32>
    %11 = arith.mulf %7, %10 : vector<24x128xf32>
    %c0_7 = arith.constant 0 : index
    %c0_8 = arith.constant 0 : index
    %c0_9 = arith.constant 0 : index
    %12 = vector.load %arg4[%c0_7, %c0_8, %c0_9] : memref<4x24x24xf32, #tpu.memory_space<vmem>>, vector<1x24x24xf32>
    %13 = vector.shape_cast %12 : vector<1x24x24xf32> to vector<24x24xf32>
    %cst_10 = arith.constant dense<0.000000e+00> : vector<24x128xf32>
    %14 = tpu.matmul %13, %11, %cst_10 {dimension_numbers = #tpu.dot_dimension_numbers<[1], [0], [0], [1], [0, 0, 1, 1], [], []>} : vector<24x24xf32>, vector<24x128xf32>, vector<24x128xf32> -> vector<24x128xf32>
    %c0_11 = arith.constant 0 : index
    %c0_12 = arith.constant 0 : index
    %c0_13 = arith.constant 0 : index
    %15 = vector.load %arg5[%c0_11, %c0_12, %c0_13] : memref<4x24x1xf32, #tpu.memory_space<vmem>>, vector<1x24x1xf32>
    %16 = vector.shape_cast %15 : vector<1x24x1xf32> to vector<24x1xf32>
    %17 = vector.broadcast %16 : vector<24x1xf32> to vector<24x128xf32>
    %18 = arith.addf %14, %17 : vector<24x128xf32>
    %cst_14 = arith.constant 0.707106769 : f32
    %19 = vector.broadcast %cst_14 : f32 to vector<24x128xf32>
    %20 = arith.mulf %19, %18 : vector<24x128xf32>
    %21 = math.erf %18 : vector<24x128xf32>
    %cst_15 = arith.constant 1.000000e+00 : f32
    %22 = vector.broadcast %cst_15 : f32 to vector<24x128xf32>
    %23 = arith.addf %22, %21 : vector<24x128xf32>
    %24 = arith.mulf %20, %23 : vector<24x128xf32>
    %c1 = arith.constant 1 : index
    %c0_16 = arith.constant 0 : index
    %c0_17 = arith.constant 0 : index
    %25 = vector.load %arg4[%c1, %c0_16, %c0_17] : memref<4x24x24xf32, #tpu.memory_space<vmem>>, vector<1x24x24xf32>
    %26 = vector.shape_cast %25 : vector<1x24x24xf32> to vector<24x24xf32>
    %cst_18 = arith.constant dense<0.000000e+00> : vector<24x128xf32>
    %27 = tpu.matmul %26, %24, %cst_18 {dimension_numbers = #tpu.dot_dimension_numbers<[1], [0], [0], [1], [0, 0, 1, 1], [], []>} : vector<24x24xf32>, vector<24x128xf32>, vector<24x128xf32> -> vector<24x128xf32>
    %c1_19 = arith.constant 1 : index
    %c0_20 = arith.constant 0 : index
    %c0_21 = arith.constant 0 : index
    %28 = vector.load %arg5[%c1_19, %c0_20, %c0_21] : memref<4x24x1xf32, #tpu.memory_space<vmem>>, vector<1x24x1xf32>
    %29 = vector.shape_cast %28 : vector<1x24x1xf32> to vector<24x1xf32>
    %30 = vector.broadcast %29 : vector<24x1xf32> to vector<24x128xf32>
    %31 = arith.addf %27, %30 : vector<24x128xf32>
    %cst_22 = arith.constant 0.707106769 : f32
    %32 = vector.broadcast %cst_22 : f32 to vector<24x128xf32>
    %33 = arith.mulf %32, %31 : vector<24x128xf32>
    %34 = math.erf %31 : vector<24x128xf32>
    %cst_23 = arith.constant 1.000000e+00 : f32
    %35 = vector.broadcast %cst_23 : f32 to vector<24x128xf32>
    %36 = arith.addf %35, %34 : vector<24x128xf32>
    %37 = arith.mulf %33, %36 : vector<24x128xf32>
    %c2 = arith.constant 2 : index
    %c0_24 = arith.constant 0 : index
    %c0_25 = arith.constant 0 : index
    %38 = vector.load %arg4[%c2, %c0_24, %c0_25] : memref<4x24x24xf32, #tpu.memory_space<vmem>>, vector<1x24x24xf32>
    %39 = vector.shape_cast %38 : vector<1x24x24xf32> to vector<24x24xf32>
    %cst_26 = arith.constant dense<0.000000e+00> : vector<24x128xf32>
    %40 = tpu.matmul %39, %37, %cst_26 {dimension_numbers = #tpu.dot_dimension_numbers<[1], [0], [0], [1], [0, 0, 1, 1], [], []>} : vector<24x24xf32>, vector<24x128xf32>, vector<24x128xf32> -> vector<24x128xf32>
    %c2_27 = arith.constant 2 : index
    %c0_28 = arith.constant 0 : index
    %c0_29 = arith.constant 0 : index
    %41 = vector.load %arg5[%c2_27, %c0_28, %c0_29] : memref<4x24x1xf32, #tpu.memory_space<vmem>>, vector<1x24x1xf32>
    %42 = vector.shape_cast %41 : vector<1x24x1xf32> to vector<24x1xf32>
    %43 = vector.broadcast %42 : vector<24x1xf32> to vector<24x128xf32>
    %44 = arith.addf %40, %43 : vector<24x128xf32>
    %cst_30 = arith.constant 0.707106769 : f32
    %45 = vector.broadcast %cst_30 : f32 to vector<24x128xf32>
    %46 = arith.mulf %45, %44 : vector<24x128xf32>
    %47 = math.erf %44 : vector<24x128xf32>
    %cst_31 = arith.constant 1.000000e+00 : f32
    %48 = vector.broadcast %cst_31 : f32 to vector<24x128xf32>
    %49 = arith.addf %48, %47 : vector<24x128xf32>
    %50 = arith.mulf %46, %49 : vector<24x128xf32>
    %c3 = arith.constant 3 : index
    %c0_32 = arith.constant 0 : index
    %c0_33 = arith.constant 0 : index
    %51 = vector.load %arg4[%c3, %c0_32, %c0_33] : memref<4x24x24xf32, #tpu.memory_space<vmem>>, vector<1x24x24xf32>
    %52 = vector.shape_cast %51 : vector<1x24x24xf32> to vector<24x24xf32>
    %cst_34 = arith.constant dense<0.000000e+00> : vector<24x128xf32>
    %53 = tpu.matmul %52, %50, %cst_34 {dimension_numbers = #tpu.dot_dimension_numbers<[1], [0], [0], [1], [0, 0, 1, 1], [], []>} : vector<24x24xf32>, vector<24x128xf32>, vector<24x128xf32> -> vector<24x128xf32>
    %c3_35 = arith.constant 3 : index
    %c0_36 = arith.constant 0 : index
    %c0_37 = arith.constant 0 : index
    %54 = vector.load %arg5[%c3_35, %c0_36, %c0_37] : memref<4x24x1xf32, #tpu.memory_space<vmem>>, vector<1x24x1xf32>
    %55 = vector.shape_cast %54 : vector<1x24x1xf32> to vector<24x1xf32>
    %56 = vector.broadcast %55 : vector<24x1xf32> to vector<24x128xf32>
    %57 = arith.addf %53, %56 : vector<24x128xf32>
    %cst_38 = arith.constant 0.707106769 : f32
    %58 = vector.broadcast %cst_38 : f32 to vector<24x128xf32>
    %59 = arith.mulf %58, %57 : vector<24x128xf32>
    %60 = math.erf %57 : vector<24x128xf32>
    %cst_39 = arith.constant 1.000000e+00 : f32
    %61 = vector.broadcast %cst_39 : f32 to vector<24x128xf32>
    %62 = arith.addf %61, %60 : vector<24x128xf32>
    %63 = arith.mulf %59, %62 : vector<24x128xf32>
    %c0_40 = arith.constant 0 : index
    %c0_41 = arith.constant 0 : index
    %64 = vector.load %arg6[%c0_40, %c0_41] : memref<96x24xf32, #tpu.memory_space<vmem>>, vector<96x24xf32>
    %cst_42 = arith.constant dense<0.000000e+00> : vector<128x96xf32>
    %65 = tpu.matmul %63, %64, %cst_42 {dimension_numbers = #tpu.dot_dimension_numbers<[0], [1], [1], [0], [0, 1, 1, 0], [], []>} : vector<24x128xf32>, vector<96x24xf32>, vector<128x96xf32> -> vector<128x96xf32>
    %c0_43 = arith.constant 0 : index
    %c0_44 = arith.constant 0 : index
    %66 = vector.load %arg7[%c0_43, %c0_44] : memref<1x96xf32, #tpu.memory_space<vmem>>, vector<1x96xf32>
    %67 = vector.broadcast %66 : vector<1x96xf32> to vector<128x96xf32>
    %68 = arith.addf %65, %67 : vector<128x96xf32>
    %cst_45 = arith.constant 0.707106769 : f32
    %69 = vector.broadcast %cst_45 : f32 to vector<128x96xf32>
    %70 = arith.mulf %69, %68 : vector<128x96xf32>
    %71 = math.erf %68 : vector<128x96xf32>
    %cst_46 = arith.constant 1.000000e+00 : f32
    %72 = vector.broadcast %cst_46 : f32 to vector<128x96xf32>
    %73 = arith.addf %72, %71 : vector<128x96xf32>
    %74 = arith.mulf %70, %73 : vector<128x96xf32>
    %c0_47 = arith.constant 0 : index
    %c0_48 = arith.constant 0 : index
    %75 = vector.load %arg8[%c0_47, %c0_48] : memref<128x96xf32, #tpu.memory_space<vmem>>, vector<128x96xf32>
    tpu.vector_store %arg8[%c0_47, %c0_48], %74 {strides = array<i32>} : memref<128x96xf32, #tpu.memory_space<vmem>>, vector<128x96xf32>,
    return
  }
  func.func @transform_0(%arg0: i32) -> (i32, i32) {
    %c0_i32 = arith.constant 0 : i32
    %c0_i32_0 = arith.constant 0 : i32
    return %c0_i32, %arg0 : i32, i32
  }
  func.func @transform_1(%arg0: i32) -> (i32, i32) {
    %c0_i32 = arith.constant 0 : i32
    %c0_i32_0 = arith.constant 0 : i32
    %c0_i32_1 = arith.constant 0 : i32
    return %c0_i32, %c0_i32_0 : i32, i32
  }
  func.func @transform_2(%arg0: i32) -> (i32, i32) {
    %c0_i32 = arith.constant 0 : i32
    %c0_i32_0 = arith.constant 0 : i32
    %c0_i32_1 = arith.constant 0 : i32
    return %c0_i32, %c0_i32_0 : i32, i32
  }
  func.func @transform_3(%arg0: i32) -> (i32, i32, i32) {
    %c0_i32 = arith.constant 0 : i32
    %c0_i32_0 = arith.constant 0 : i32
    %c0_i32_1 = arith.constant 0 : i32
    %c0_i32_2 = arith.constant 0 : i32
    return %c0_i32, %c0_i32_0, %c0_i32_1 : i32, i32, i32
  }
  func.func @transform_4(%arg0: i32) -> (i32, i32, i32) {
    %c0_i32 = arith.constant 0 : i32
    %c0_i32_0 = arith.constant 0 : i32
    %c0_i32_1 = arith.constant 0 : i32
    %c0_i32_2 = arith.constant 0 : i32
    return %c0_i32, %c0_i32_0, %c0_i32_1 : i32, i32, i32
  }
  func.func @transform_5(%arg0: i32) -> (i32, i32) {
    %c0_i32 = arith.constant 0 : i32
    %c0_i32_0 = arith.constant 0 : i32
    %c0_i32_1 = arith.constant 0 : i32
    return %c0_i32, %c0_i32_0 : i32, i32
  }
  func.func @transform_6(%arg0: i32) -> (i32, i32) {
    %c0_i32 = arith.constant 0 : i32
    %c0_i32_0 = arith.constant 0 : i32
    %c0_i32_1 = arith.constant 0 : i32
    return %c0_i32, %c0_i32_0 : i32, i32
  }
  func.func @transform_7(%arg0: i32) -> (i32, i32) {
    %c0_i32 = arith.constant 0 : i32
    %c0_i32_0 = arith.constant 0 : i32
    return %arg0, %c0_i32 : i32, i32
  }
}

</mosaic_0001>

<llo_original>
// kernel: branch_forward.1
$region0: #{branch_forward.1}
  #allocation0 [shape = 'u32[]', space=smem, size = 0x4, offset = 0x4, fixed_abs, tag = 'smem constant byte address 0x4 - core index']
  #allocation1 [shape = 'u32[72,128]{1,0:T(1,128)}', space=vmem, size = 0x9000, scoped, tag = 'internal scratch']
  %s0 = inlined_call_operand.vmem [shape: f32[6,128], index: 0, kind: input, shape index: {}]
  %s1 = inlined_call_operand.vmem [shape: f32[24,6], index: 1, kind: input, shape index: {}]
  %s2 = inlined_call_operand.vmem [shape: f32[24,1], index: 2, kind: input, shape index: {}]
  %s3 = inlined_call_operand.vmem [shape: f32[4,24,24], index: 3, kind: input, shape index: {}]
  %s4 = inlined_call_operand.vmem [shape: f32[4,24,1], index: 4, kind: input, shape index: {}]
  %s5 = inlined_call_operand.vmem [shape: f32[96,24], index: 5, kind: input, shape index: {}]
  %s6 = inlined_call_operand.vmem [shape: f32[1,96], index: 6, kind: input, shape index: {}]
  %s7 = inlined_call_operand.hbm [shape: f32[16,96], index: 7, kind: output, shape index: {}]
  %s8 = sld [smem:[#allocation0]]
  $region38: #{branch_forward.1} parent=0
    _
  %s10 = ssub.s32 1, %s8
  %s11 = scalar_select 0, %s10, %s8
  $region1: #{branch_forward.1} parent=0
    #allocation2 [shape = 'u8[65536]{0}', space=vmem, size = 0x10000, scoped, tag = 'output window, operand 0, single buffered']
    #allocation3 [shape = 's32[1]{0}', space=sflag, size = 0x4, scoped, tag = 'scoped memory for branch_forward.1']
    %12 = vsyncpa [#allocation3], 0
    // Predicated region
    $region2: #{branch_forward.1} parent=1 // pred_check
      _
    $region3: #{branch_forward.1} parent=1 // pred_check_branch
      %14 = sbr.rel (0) target = $region5
    $region4: #{branch_forward.1} parent=1 // pred_region
      _
    $region5: #{branch_forward.1} parent=1 // pred_fallthru
      _
    // Predicated region
    $region6: #{branch_forward.1} parent=1 // pred_check
      _
    $region7: #{branch_forward.1} parent=1 // pred_check_branch
      %16 = sbr.rel (0) target = $region9
    $region8: #{branch_forward.1} parent=1 // pred_region
      _
    $region9: #{branch_forward.1} parent=1 // pred_fallthru
      _
    // Predicated region
    $region10: #{branch_forward.1} parent=1 // pred_check
      _
    $region11: #{branch_forward.1} parent=1 // pred_check_branch
      %18 = sbr.rel (0) target = $region13
    $region12: #{branch_forward.1} parent=1 // pred_region
      _
    $region13: #{branch_forward.1} parent=1 // pred_fallthru
      _
    // Predicated region
    $region14: #{branch_forward.1} parent=1 // pred_check
      _
    $region15: #{branch_forward.1} parent=1 // pred_check_branch
      %20 = sbr.rel (0) target = $region17
    $region16: #{branch_forward.1} parent=1 // pred_region
      _
    $region17: #{branch_forward.1} parent=1 // pred_fallthru
      _
    // Predicated region
    $region18: #{branch_forward.1} parent=1 // pred_check
      _
    $region19: #{branch_forward.1} parent=1 // pred_check_branch
      %22 = sbr.rel (0) target = $region21
    $region20: #{branch_forward.1} parent=1 // pred_region
      _
    $region21: #{branch_forward.1} parent=1 // pred_fallthru
      _
    // Predicated region
    $region22: #{branch_forward.1} parent=1 // pred_check
      _
    $region23: #{branch_forward.1} parent=1 // pred_check_branch
      %24 = sbr.rel (0) target = $region25
    $region24: #{branch_forward.1} parent=1 // pred_region
      _
    $region25: #{branch_forward.1} parent=1 // pred_fallthru
      _
    // Predicated region
    $region26: #{branch_forward.1} parent=1 // pred_check
      _
    $region27: #{branch_forward.1} parent=1 // pred_check_branch
      %26 = sbr.rel (0) target = $region29
    $region28: #{branch_forward.1} parent=1 // pred_region
      _
    $region29: #{branch_forward.1} parent=1 // pred_fallthru
      _
    %v27 = vld [vmem:[%s0] sm:$0x3f]
    %v28 = vld [vmem:[%s1] sm:$0xff]
    %v29 = vld [vmem:[%s1 + $0x8] sm:$0xff]
    %v30 = vld [vmem:[%s1 + $0x10] sm:$0xff]
    %v31 = vld [vmem:[%s2] sm:$0xff]
    %v32 = vld [vmem:[%s2 + $0x8] sm:$0xff]
    %v33 = vld [vmem:[%s2 + $0x10] sm:$0xff]
    %35 = vset.pattern.permute.xlu0 0
    %36 = vperm.xlu0 %35, %v31
    %v37 = vpop.permute.xlu0 %36
    %40 = vset.pattern.permute.xlu0 0
    %41 = vperm.xlu0 %40, %v32
    %v42 = vpop.permute.xlu0 %41
    %45 = vset.pattern.permute.xlu0 0
    %46 = vperm.xlu0 %45, %v33
    %v47 = vpop.permute.xlu0 %46
    %vm49 = vcmask 48128
    %v51 = vsel %vm49, %v28, 0
    %v54 = vsel %vm49, %v29, 0
    %v57 = vsel %vm49, %v30, 0
    %vm59 = vcmask 1045504
    %v61 = vsel %vm59, %v27, 0
    %63 = vmatpush.msra.mxu0 0.0
    %64 = vmatpush.msra.mxu0 0.0
    %65 = vmatpush.msra.mxu0 0.0
    %66 = vmatpush.msra.mxu0 0.0
    %67 = vmatpush.msra.mxu0 0.0
    %68 = vmatpush.msra.mxu0 0.0
    %69 = vmatpush.msra.mxu0 0.0
    %70 = vmatpush.msra.mxu0 0.0
    %71 = vmatpush.msra.mxu0 0.0
    %72 = vmatpush.msra.mxu0 0.0
    %73 = vmatpush.msra.mxu0 0.0
    %74 = vmatpush.msra.mxu0 0.0
    %75 = vmatpush.msra.mxu0 0.0
    %76 = vmatpush.msra.mxu0 0.0
    %77 = vmatpush.msra.mxu0 0.0
    %78 = vmatpush.msra.mxu0 %v61
    %79 = vmatmul.f32.gmra.mxu0 %v51
    %v80 = vpop.f32.mrf.mxu0
    %v81 = vadd.f32 %v37, %v80
    %82 = vmatmul.f32.gmra.mxu0 %v54
    %v83 = vpop.f32.mrf.mxu0
    %v84 = vadd.f32 %v42, %v83
    %85 = vmatmul.f32.gmra.mxu0 %v57
    %v86 = vpop.f32.mrf.mxu0
    %v87 = vadd.f32 %v47, %v86
    %88 = vdwg.mxu0
    %v89 = vmul.f32 %v81, 0.70710677
    %v90 = vmul.f32 %v84, 0.70710677
    %v91 = vmul.f32 %v87, 0.70710677
    %v92 = vmul.f32 %v81, %v81
    %v93 = vmin.f32 16.0, %v92
    %v94 = vmul.f32 %v93, 2.1237322e-06
    %v95 = vadd.f32 %v94, 0.00028619796
    %v96 = vmul.f32 %v93, %v95
    %v97 = vadd.f32 %v96, 0.0036580483
    %v98 = vmul.f32 %v93, %v97
    %v99 = vadd.f32 %v98, 0.05243302
    %v100 = vmul.f32 %v93, %v99
    %v101 = vadd.f32 %v100, 0.18741608
    %v102 = vmul.f32 %v93, %v101
    %v103 = vadd.f32 %v102, 1.1283791
    %v104 = vmul.f32 %v81, %v103
    %v105 = vmul.f32 %v93, 3.8918573e-05
    %v106 = vadd.f32 %v105, 0.001143296
    %v107 = vmul.f32 %v93, %v106
    %v108 = vadd.f32 %v107, 0.014752088
    %v109 = vmul.f32 %v93, %v108
    %v110 = vadd.f32 %v109, 0.112945676
    %v111 = vmul.f32 %v93, %v110
    %v112 = vadd.f32 %v111, 0.4994258
    %v113 = vmul.f32 %v93, %v112
    %v114 = vadd.f32 %v113, 1.0
    %v115 = vrcp.pop %v114
    %v116 = vmul.f32 %v114, %v115
    %v117 = vsub.f32 1.0, %v116
    %v118 = vmul.f32 %v115, %v117
    %v119 = vadd.f32 %v115, %v118
    %vm120 = vweird.f32 %v114
    %vm121 = vweird.f32 %v115
    %vm122 = vmor %vm120, %vm121
    %v123 = vsel %vm122, %v115, %v119
    %v124 = vand.u32 2147483647, %v114
    %vm125 = vcmp.eq.f32.partialorder %v124, 8.507059e+37
    %v126 = vand.u32 %v114, 2147483648
    %v127 = vor.u32 1.1754944e-38, %v126
    %v128 = vsel %vm125, %v127, %v123
    %v129 = vmul.f32 %v104, %v128
    %v130 = vmin.f32 %v129, 1.0
    %v131 = vmax.f32 %v130, -1.0
    %v132 = vmul.f32 %v84, %v84
    %v133 = vmin.f32 16.0, %v132
    %v134 = vmul.f32 %v133, 2.1237322e-06
    %v135 = vadd.f32 %v134, 0.00028619796
    %v136 = vmul.f32 %v133, %v135
    %v137 = vadd.f32 %v136, 0.0036580483
    %v138 = vmul.f32 %v133, %v137
    %v139 = vadd.f32 %v138, 0.05243302
    %v140 = vmul.f32 %v133, %v139
    %v141 = vadd.f32 %v140, 0.18741608
    %v142 = vmul.f32 %v133, %v141
    %v143 = vadd.f32 %v142, 1.1283791
    %v144 = vmul.f32 %v84, %v143
    %v145 = vmul.f32 %v133, 3.8918573e-05
    %v146 = vadd.f32 %v145, 0.001143296
    %v147 = vmul.f32 %v133, %v146
    %v148 = vadd.f32 %v147, 0.014752088
    %v149 = vmul.f32 %v133, %v148
    %v150 = vadd.f32 %v149, 0.112945676
    %v151 = vmul.f32 %v133, %v150
    %v152 = vadd.f32 %v151, 0.4994258
    %v153 = vmul.f32 %v133, %v152
    %v154 = vadd.f32 %v153, 1.0
    %v155 = vrcp.pop %v154
    %v156 = vmul.f32 %v154, %v155
    %v157 = vsub.f32 1.0, %v156
    %v158 = vmul.f32 %v155, %v157
    %v159 = vadd.f32 %v155, %v158
    %vm160 = vweird.f32 %v154
    %vm161 = vweird.f32 %v155
    %vm162 = vmor %vm160, %vm161
    %v163 = vsel %vm162, %v155, %v159
    %v164 = vand.u32 2147483647, %v154
    %vm165 = vcmp.eq.f32.partialorder %v164, 8.507059e+37
    %v166 = vand.u32 %v154, 2147483648
    %v167 = vor.u32 1.1754944e-38, %v166
    %v168 = vsel %vm165, %v167, %v163
    %v169 = vmul.f32 %v144, %v168
    %v170 = vmin.f32 %v169, 1.0
    %v171 = vmax.f32 %v170, -1.0
    %v172 = vmul.f32 %v87, %v87
    %v173 = vmin.f32 16.0, %v172
    %v174 = vmul.f32 %v173, 2.1237322e-06
    %v175 = vadd.f32 %v174, 0.00028619796
    %v176 = vmul.f32 %v173, %v175
    %v177 = vadd.f32 %v176, 0.0036580483
    %v178 = vmul.f32 %v173, %v177
    %v179 = vadd.f32 %v178, 0.05243302
    %v180 = vmul.f32 %v173, %v179
    %v181 = vadd.f32 %v180, 0.18741608
    %v182 = vmul.f32 %v173, %v181
    %v183 = vadd.f32 %v182, 1.1283791
    %v184 = vmul.f32 %v87, %v183
    %v185 = vmul.f32 %v173, 3.8918573e-05
    %v186 = vadd.f32 %v185, 0.001143296
    %v187 = vmul.f32 %v173, %v186
    %v188 = vadd.f32 %v187, 0.014752088
    %v189 = vmul.f32 %v173, %v188
    %v190 = vadd.f32 %v189, 0.112945676
    %v191 = vmul.f32 %v173, %v190
    %v192 = vadd.f32 %v191, 0.4994258
    %v193 = vmul.f32 %v173, %v192
    %v194 = vadd.f32 %v193, 1.0
    %v195 = vrcp.pop %v194
    %v196 = vmul.f32 %v194, %v195
    %v197 = vsub.f32 1.0, %v196
    %v198 = vmul.f32 %v195, %v197
    %v199 = vadd.f32 %v195, %v198
    %vm200 = vweird.f32 %v194
    %vm201 = vweird.f32 %v195
    %vm202 = vmor %vm200, %vm201
    %v203 = vsel %vm202, %v195, %v199
    %v204 = vand.u32 2147483647, %v194
    %vm205 = vcmp.eq.f32.partialorder %v204, 8.507059e+37
    %v206 = vand.u32 %v194, 2147483648
    %v207 = vor.u32 1.1754944e-38, %v206
    %v208 = vsel %vm205, %v207, %v203
    %v209 = vmul.f32 %v184, %v208
    %v210 = vmin.f32 %v209, 1.0
    %v211 = vmax.f32 %v210, -1.0
    %v212 = vadd.f32 %v131, 1.0
    %v213 = vadd.f32 %v171, 1.0
    %v214 = vadd.f32 %v211, 1.0
    %v215 = vmul.f32 %v89, %v212
    %v216 = vmul.f32 %v90, %v213
    %v217 = vmul.f32 %v91, %v214
    %v218 = vld [vmem:[%s3] sm:$0xff]
    %v219 = vld [vmem:[%s3 + $0x8] sm:$0xff]
    %v220 = vld [vmem:[%s3 + $0x10] sm:$0xff]
    %v221 = vld [vmem:[%s4] sm:$0xff]
    %v222 = vld [vmem:[%s4 + $0x8] sm:$0xff]
    %v223 = vld [vmem:[%s4 + $0x10] sm:$0xff]
    %225 = vset.pattern.permute.xlu0 0
    %226 = vperm.xlu0 %225, %v221
    %v227 = vpop.permute.xlu0 %226
    %230 = vset.pattern.permute.xlu0 0
    %231 = vperm.xlu0 %230, %v222
    %v232 = vpop.permute.xlu0 %231
    %235 = vset.pattern.permute.xlu0 0
    %236 = vperm.xlu0 %235, %v223
    %v237 = vpop.permute.xlu0 %236
    %vm239 = vcmask 195584
    %v241 = vsel %vm239, %v218, 0
    %v244 = vsel %vm239, %v219, 0
    %v247 = vsel %vm239, %v220, 0
    %249 = vmatpush.msra.mxu0 0.0
    %250 = vmatpush.msra.mxu0 0.0
    %251 = vmatpush.msra.mxu0 0.0
    %252 = vmatpush.msra.mxu0 0.0
    %253 = vmatpush.msra.mxu0 0.0
    %254 = vmatpush.msra.mxu0 0.0
    %255 = vmatpush.msra.mxu0 0.0
    %256 = vmatpush.msra.mxu0 0.0
    %257 = vmatpush.msra.mxu0 0.0
    %258 = vmatpush.msra.mxu0 0.0
    %259 = vmatpush.msra.mxu0 0.0
    %260 = vmatpush.msra.mxu0 0.0
    %261 = vmatpush.msra.mxu0 0.0
    %262 = vmatpush.msra.mxu0 %v217
    %263 = vmatpush.msra.mxu0 %v216
    %264 = vmatpush.msra.mxu0 %v215
    %265 = vmatmul.f32.gmra.mxu0 %v241
    %v266 = vpop.f32.mrf.mxu0
    %v267 = vadd.f32 %v227, %v266
    %268 = vmatmul.f32.gmra.mxu0 %v244
    %v269 = vpop.f32.mrf.mxu0
    %v270 = vadd.f32 %v232, %v269
    %271 = vmatmul.f32.gmra.mxu0 %v247
    %v272 = vpop.f32.mrf.mxu0
    %v273 = vadd.f32 %v237, %v272
    %274 = vdwg.mxu0
    %v275 = vmul.f32 %v267, 0.70710677
    %v276 = vmul.f32 %v270, 0.70710677
    %v277 = vmul.f32 %v273, 0.70710677
    %v278 = vmul.f32 %v267, %v267
    %v279 = vmin.f32 16.0, %v278
    %v280 = vmul.f32 %v279, 2.1237322e-06
    %v281 = vadd.f32 %v280, 0.00028619796
    %v282 = vmul.f32 %v279, %v281
    %v283 = vadd.f32 %v282, 0.0036580483
    %v284 = vmul.f32 %v279, %v283
    %v285 = vadd.f32 %v284, 0.05243302
    %v286 = vmul.f32 %v279, %v285
    %v287 = vadd.f32 %v286, 0.18741608
    %v288 = vmul.f32 %v279, %v287
    %v289 = vadd.f32 %v288, 1.1283791
    %v290 = vmul.f32 %v267, %v289
    %v291 = vmul.f32 %v279, 3.8918573e-05
    %v292 = vadd.f32 %v291, 0.001143296
    %v293 = vmul.f32 %v279, %v292
    %v294 = vadd.f32 %v293, 0.014752088
    %v295 = vmul.f32 %v279, %v294
    %v296 = vadd.f32 %v295, 0.112945676
    %v297 = vmul.f32 %v279, %v296
    %v298 = vadd.f32 %v297, 0.4994258
    %v299 = vmul.f32 %v279, %v298
    %v300 = vadd.f32 %v299, 1.0
    %v301 = vrcp.pop %v300
    %v302 = vmul.f32 %v300, %v301
    %v303 = vsub.f32 1.0, %v302
    %v304 = vmul.f32 %v301, %v303
    %v305 = vadd.f32 %v301, %v304
    %vm306 = vweird.f32 %v300
    %vm307 = vweird.f32 %v301
    %vm308 = vmor %vm306, %vm307
    %v309 = vsel %vm308, %v301, %v305
    %v310 = vand.u32 2147483647, %v300
    %vm311 = vcmp.eq.f32.partialorder %v310, 8.507059e+37
    %v312 = vand.u32 %v300, 2147483648
    %v313 = vor.u32 1.1754944e-38, %v312
    %v314 = vsel %vm311, %v313, %v309
    %v315 = vmul.f32 %v290, %v314
    %v316 = vmin.f32 %v315, 1.0
    %v317 = vmax.f32 %v316, -1.0
    %v318 = vmul.f32 %v270, %v270
    %v319 = vmin.f32 16.0, %v318
    %v320 = vmul.f32 %v319, 2.1237322e-06
    %v321 = vadd.f32 %v320, 0.00028619796
    %v322 = vmul.f32 %v319, %v321
    %v323 = vadd.f32 %v322, 0.0036580483
    %v324 = vmul.f32 %v319, %v323
    %v325 = vadd.f32 %v324, 0.05243302
    %v326 = vmul.f32 %v319, %v325
    %v327 = vadd.f32 %v326, 0.18741608
    %v328 = vmul.f32 %v319, %v327
    %v329 = vadd.f32 %v328, 1.1283791
    %v330 = vmul.f32 %v270, %v329
    %v331 = vmul.f32 %v319, 3.8918573e-05
    %v332 = vadd.f32 %v331, 0.001143296
    %v333 = vmul.f32 %v319, %v332
    %v334 = vadd.f32 %v333, 0.014752088
    %v335 = vmul.f32 %v319, %v334
    %v336 = vadd.f32 %v335, 0.112945676
    %v337 = vmul.f32 %v319, %v336
    %v338 = vadd.f32 %v337, 0.4994258
    %v339 = vmul.f32 %v319, %v338
    %v340 = vadd.f32 %v339, 1.0
    %v341 = vrcp.pop %v340
    %v342 = vmul.f32 %v340, %v341
    %v343 = vsub.f32 1.0, %v342
    %v344 = vmul.f32 %v341, %v343
    %v345 = vadd.f32 %v341, %v344
    %vm346 = vweird.f32 %v340
    %vm347 = vweird.f32 %v341
    %vm348 = vmor %vm346, %vm347
    %v349 = vsel %vm348, %v341, %v345
    %v350 = vand.u32 2147483647, %v340
    %vm351 = vcmp.eq.f32.partialorder %v350, 8.507059e+37
    %v352 = vand.u32 %v340, 2147483648
    %v353 = vor.u32 1.1754944e-38, %v352
    %v354 = vsel %vm351, %v353, %v349
    %v355 = vmul.f32 %v330, %v354
    %v356 = vmin.f32 %v355, 1.0
    %v357 = vmax.f32 %v356, -1.0
    %v358 = vmul.f32 %v273, %v273
    %v359 = vmin.f32 16.0, %v358
    %v360 = vmul.f32 %v359, 2.1237322e-06
    %v361 = vadd.f32 %v360, 0.00028619796
    %v362 = vmul.f32 %v359, %v361
    %v363 = vadd.f32 %v362, 0.0036580483
    %v364 = vmul.f32 %v359, %v363
    %v365 = vadd.f32 %v364, 0.05243302
    %v366 = vmul.f32 %v359, %v365
    %v367 = vadd.f32 %v366, 0.18741608
    %v368 = vmul.f32 %v359, %v367
    %v369 = vadd.f32 %v368, 1.1283791
    %v370 = vmul.f32 %v273, %v369
    %v371 = vmul.f32 %v359, 3.8918573e-05
    %v372 = vadd.f32 %v371, 0.001143296
    %v373 = vmul.f32 %v359, %v372
    %v374 = vadd.f32 %v373, 0.014752088
    %v375 = vmul.f32 %v359, %v374
    %v376 = vadd.f32 %v375, 0.112945676
    %v377 = vmul.f32 %v359, %v376
    %v378 = vadd.f32 %v377, 0.4994258
    %v379 = vmul.f32 %v359, %v378
    %v380 = vadd.f32 %v379, 1.0
    %v381 = vrcp.pop %v380
    %v382 = vmul.f32 %v380, %v381
    %v383 = vsub.f32 1.0, %v382
    %v384 = vmul.f32 %v381, %v383
    %v385 = vadd.f32 %v381, %v384
    %vm386 = vweird.f32 %v380
    %vm387 = vweird.f32 %v381
    %vm388 = vmor %vm386, %vm387
    %v389 = vsel %vm388, %v381, %v385
    %v390 = vand.u32 2147483647, %v380
    %vm391 = vcmp.eq.f32.partialorder %v390, 8.507059e+37
    %v392 = vand.u32 %v380, 2147483648
    %v393 = vor.u32 1.1754944e-38, %v392
    %v394 = vsel %vm391, %v393, %v389
    %v395 = vmul.f32 %v370, %v394
    %v396 = vmin.f32 %v395, 1.0
    %v397 = vmax.f32 %v396, -1.0
    %v398 = vadd.f32 %v317, 1.0
    %v399 = vadd.f32 %v357, 1.0
    %v400 = vadd.f32 %v397, 1.0
    %v401 = vmul.f32 %v275, %v398
    %v402 = vmul.f32 %v276, %v399
    %v403 = vmul.f32 %v277, %v400
    %s404 = scalar_lea.vmem %s3, 24
    %v405 = vld [vmem:[%s404] sm:$0xff]
    %v406 = vld [vmem:[%s404 + $0x8] sm:$0xff]
    %v407 = vld [vmem:[%s404 + $0x10] sm:$0xff]
    %s408 = scalar_lea.vmem %s4, 24
    %v409 = vld [vmem:[%s408] sm:$0xff]
    %v410 = vld [vmem:[%s408 + $0x8] sm:$0xff]
    %v411 = vld [vmem:[%s408 + $0x10] sm:$0xff]
    %413 = vset.pattern.permute.xlu0 0
    %414 = vperm.xlu0 %413, %v409
    %v415 = vpop.permute.xlu0 %414
    %418 = vset.pattern.permute.xlu0 0
    %419 = vperm.xlu0 %418, %v410
    %v420 = vpop.permute.xlu0 %419
    %423 = vset.pattern.permute.xlu0 0
    %424 = vperm.xlu0 %423, %v411
    %v425 = vpop.permute.xlu0 %424
    %v428 = vsel %vm239, %v405, 0
    %v431 = vsel %vm239, %v406, 0
    %v434 = vsel %vm239, %v407, 0
    %436 = vmatpush.msra.mxu0 0.0
    %437 = vmatpush.msra.mxu0 0.0
    %438 = vmatpush.msra.mxu0 0.0
    %439 = vmatpush.msra.mxu0 0.0
    %440 = vmatpush.msra.mxu0 0.0
    %441 = vmatpush.msra.mxu0 0.0
    %442 = vmatpush.msra.mxu0 0.0
    %443 = vmatpush.msra.mxu0 0.0
    %444 = vmatpush.msra.mxu0 0.0
    %445 = vmatpush.msra.mxu0 0.0
    %446 = vmatpush.msra.mxu0 0.0
    %447 = vmatpush.msra.mxu0 0.0
    %448 = vmatpush.msra.mxu0 0.0
    %449 = vmatpush.msra.mxu0 %v403
    %450 = vmatpush.msra.mxu0 %v402
    %451 = vmatpush.msra.mxu0 %v401
    %452 = vmatmul.f32.gmra.mxu0 %v428
    %v453 = vpop.f32.mrf.mxu0
    %v454 = vadd.f32 %v415, %v453
    %455 = vmatmul.f32.gmra.mxu0 %v431
    %v456 = vpop.f32.mrf.mxu0
    %v457 = vadd.f32 %v420, %v456
    %458 = vmatmul.f32.gmra.mxu0 %v434
    %v459 = vpop.f32.mrf.mxu0
    %v460 = vadd.f32 %v425, %v459
    %461 = vdwg.mxu0
    %v462 = vmul.f32 %v454, 0.70710677
    %v463 = vmul.f32 %v457, 0.70710677
    %v464 = vmul.f32 %v460, 0.70710677
    %v465 = vmul.f32 %v454, %v454
    %v466 = vmin.f32 16.0, %v465
    %v467 = vmul.f32 %v466, 2.1237322e-06
    %v468 = vadd.f32 %v467, 0.00028619796
    %v469 = vmul.f32 %v466, %v468
    %v470 = vadd.f32 %v469, 0.0036580483
    %v471 = vmul.f32 %v466, %v470
    %v472 = vadd.f32 %v471, 0.05243302
    %v473 = vmul.f32 %v466, %v472
    %v474 = vadd.f32 %v473, 0.18741608
    %v475 = vmul.f32 %v466, %v474
    %v476 = vadd.f32 %v475, 1.1283791
    %v477 = vmul.f32 %v454, %v476
    %v478 = vmul.f32 %v466, 3.8918573e-05
    %v479 = vadd.f32 %v478, 0.001143296
    %v480 = vmul.f32 %v466, %v479
    %v481 = vadd.f32 %v480, 0.014752088
    %v482 = vmul.f32 %v466, %v481
    %v483 = vadd.f32 %v482, 0.112945676
    %v484 = vmul.f32 %v466, %v483
    %v485 = vadd.f32 %v484, 0.4994258
    %v486 = vmul.f32 %v466, %v485
    %v487 = vadd.f32 %v486, 1.0
    %v488 = vrcp.pop %v487
    %v489 = vmul.f32 %v487, %v488
    %v490 = vsub.f32 1.0, %v489
    %v491 = vmul.f32 %v488, %v490
    %v492 = vadd.f32 %v488, %v491
    %vm493 = vweird.f32 %v487
    %vm494 = vweird.f32 %v488
    %vm495 = vmor %vm493, %vm494
    %v496 = vsel %vm495, %v488, %v492
    %v497 = vand.u32 2147483647, %v487
    %vm498 = vcmp.eq.f32.partialorder %v497, 8.507059e+37
    %v499 = vand.u32 %v487, 2147483648
    %v500 = vor.u32 1.1754944e-38, %v499
    %v501 = vsel %vm498, %v500, %v496
    %v502 = vmul.f32 %v477, %v501
    %v503 = vmin.f32 %v502, 1.0
    %v504 = vmax.f32 %v503, -1.0
    %v505 = vmul.f32 %v457, %v457
    %v506 = vmin.f32 16.0, %v505
    %v507 = vmul.f32 %v506, 2.1237322e-06
    %v508 = vadd.f32 %v507, 0.00028619796
    %v509 = vmul.f32 %v506, %v508
    %v510 = vadd.f32 %v509, 0.0036580483
    %v511 = vmul.f32 %v506, %v510
    %v512 = vadd.f32 %v511, 0.05243302
    %v513 = vmul.f32 %v506, %v512
    %v514 = vadd.f32 %v513, 0.18741608
    %v515 = vmul.f32 %v506, %v514
    %v516 = vadd.f32 %v515, 1.1283791
    %v517 = vmul.f32 %v457, %v516
    %v518 = vmul.f32 %v506, 3.8918573e-05
    %v519 = vadd.f32 %v518, 0.001143296
    %v520 = vmul.f32 %v506, %v519
    %v521 = vadd.f32 %v520, 0.014752088
    %v522 = vmul.f32 %v506, %v521
    %v523 = vadd.f32 %v522, 0.112945676
    %v524 = vmul.f32 %v506, %v523
    %v525 = vadd.f32 %v524, 0.4994258
    %v526 = vmul.f32 %v506, %v525
    %v527 = vadd.f32 %v526, 1.0
    %v528 = vrcp.pop %v527
    %v529 = vmul.f32 %v527, %v528
    %v530 = vsub.f32 1.0, %v529
    %v531 = vmul.f32 %v528, %v530
    %v532 = vadd.f32 %v528, %v531
    %vm533 = vweird.f32 %v527
    %vm534 = vweird.f32 %v528
    %vm535 = vmor %vm533, %vm534
    %v536 = vsel %vm535, %v528, %v532
    %v537 = vand.u32 2147483647, %v527
    %vm538 = vcmp.eq.f32.partialorder %v537, 8.507059e+37
    %v539 = vand.u32 %v527, 2147483648
    %v540 = vor.u32 1.1754944e-38, %v539
    %v541 = vsel %vm538, %v540, %v536
    %v542 = vmul.f32 %v517, %v541
    %v543 = vmin.f32 %v542, 1.0
    %v544 = vmax.f32 %v543, -1.0
    %v545 = vmul.f32 %v460, %v460
    %v546 = vmin.f32 16.0, %v545
    %v547 = vmul.f32 %v546, 2.1237322e-06
    %v548 = vadd.f32 %v547, 0.00028619796
    %v549 = vmul.f32 %v546, %v548
    %v550 = vadd.f32 %v549, 0.0036580483
    %v551 = vmul.f32 %v546, %v550
    %v552 = vadd.f32 %v551, 0.05243302
    %v553 = vmul.f32 %v546, %v552
    %v554 = vadd.f32 %v553, 0.18741608
    %v555 = vmul.f32 %v546, %v554
    %v556 = vadd.f32 %v555, 1.1283791
    %v557 = vmul.f32 %v460, %v556
    %v558 = vmul.f32 %v546, 3.8918573e-05
    %v559 = vadd.f32 %v558, 0.001143296
    %v560 = vmul.f32 %v546, %v559
    %v561 = vadd.f32 %v560, 0.014752088
    %v562 = vmul.f32 %v546, %v561
    %v563 = vadd.f32 %v562, 0.112945676
    %v564 = vmul.f32 %v546, %v563
    %v565 = vadd.f32 %v564, 0.4994258
    %v566 = vmul.f32 %v546, %v565
    %v567 = vadd.f32 %v566, 1.0
    %v568 = vrcp.pop %v567
    %v569 = vmul.f32 %v567, %v568
    %v570 = vsub.f32 1.0, %v569
    %v571 = vmul.f32 %v568, %v570
    %v572 = vadd.f32 %v568, %v571
    %vm573 = vweird.f32 %v567
    %vm574 = vweird.f32 %v568
    %vm575 = vmor %vm573, %vm574
    %v576 = vsel %vm575, %v568, %v572
    %v577 = vand.u32 2147483647, %v567
    %vm578 = vcmp.eq.f32.partialorder %v577, 8.507059e+37
    %v579 = vand.u32 %v567, 2147483648
    %v580 = vor.u32 1.1754944e-38, %v579
    %v581 = vsel %vm578, %v580, %v576
    %v582 = vmul.f32 %v557, %v581
    %v583 = vmin.f32 %v582, 1.0
    %v584 = vmax.f32 %v583, -1.0
    %v585 = vadd.f32 %v504, 1.0
    %v586 = vadd.f32 %v544, 1.0
    %v587 = vadd.f32 %v584, 1.0
    %v588 = vmul.f32 %v462, %v585
    %v589 = vmul.f32 %v463, %v586
    %v590 = vmul.f32 %v464, %v587
    %s591 = scalar_lea.vmem %s3, 48
    %v592 = vld [vmem:[%s591] sm:$0xff]
    %v593 = vld [vmem:[%s591 + $0x8] sm:$0xff]
    %v594 = vld [vmem:[%s591 + $0x10] sm:$0xff]
    %s595 = scalar_lea.vmem %s4, 48
    %v596 = vld [vmem:[%s595] sm:$0xff]
    %v597 = vld [vmem:[%s595 + $0x8] sm:$0xff]
    %v598 = vld [vmem:[%s595 + $0x10] sm:$0xff]
    %600 = vset.pattern.permute.xlu0 0
    %601 = vperm.xlu0 %600, %v596
    %v602 = vpop.permute.xlu0 %601
    %605 = vset.pattern.permute.xlu0 0
    %606 = vperm.xlu0 %605, %v597
    %v607 = vpop.permute.xlu0 %606
    %610 = vset.pattern.permute.xlu0 0
    %611 = vperm.xlu0 %610, %v598
    %v612 = vpop.permute.xlu0 %611
    %v615 = vsel %vm239, %v592, 0
    %v618 = vsel %vm239, %v593, 0
    %v621 = vsel %vm239, %v594, 0
    %623 = vmatpush.msra.mxu0 0.0
    %624 = vmatpush.msra.mxu0 0.0
    %625 = vmatpush.msra.mxu0 0.0
    %626 = vmatpush.msra.mxu0 0.0
    %627 = vmatpush.msra.mxu0 0.0
    %628 = vmatpush.msra.mxu0 0.0
    %629 = vmatpush.msra.mxu0 0.0
    %630 = vmatpush.msra.mxu0 0.0
    %631 = vmatpush.msra.mxu0 0.0
    %632 = vmatpush.msra.mxu0 0.0
    %633 = vmatpush.msra.mxu0 0.0
    %634 = vmatpush.msra.mxu0 0.0
    %635 = vmatpush.msra.mxu0 0.0
    %636 = vmatpush.msra.mxu0 %v590
    %637 = vmatpush.msra.mxu0 %v589
    %638 = vmatpush.msra.mxu0 %v588
    %639 = vmatmul.f32.gmra.mxu0 %v615
    %v640 = vpop.f32.mrf.mxu0
    %v641 = vadd.f32 %v602, %v640
    %642 = vmatmul.f32.gmra.mxu0 %v618
    %v643 = vpop.f32.mrf.mxu0
    %v644 = vadd.f32 %v607, %v643
    %645 = vmatmul.f32.gmra.mxu0 %v621
    %v646 = vpop.f32.mrf.mxu0
    %v647 = vadd.f32 %v612, %v646
    %648 = vdwg.mxu0
    %v649 = vmul.f32 %v641, 0.70710677
    %v650 = vmul.f32 %v644, 0.70710677
    %v651 = vmul.f32 %v647, 0.70710677
    %v652 = vmul.f32 %v641, %v641
    %v653 = vmin.f32 16.0, %v652
    %v654 = vmul.f32 %v653, 2.1237322e-06
    %v655 = vadd.f32 %v654, 0.00028619796
    %v656 = vmul.f32 %v653, %v655
    %v657 = vadd.f32 %v656, 0.0036580483
    %v658 = vmul.f32 %v653, %v657
    %v659 = vadd.f32 %v658, 0.05243302
    %v660 = vmul.f32 %v653, %v659
    %v661 = vadd.f32 %v660, 0.18741608
    %v662 = vmul.f32 %v653, %v661
    %v663 = vadd.f32 %v662, 1.1283791
    %v664 = vmul.f32 %v641, %v663
    %v665 = vmul.f32 %v653, 3.8918573e-05
    %v666 = vadd.f32 %v665, 0.001143296
    %v667 = vmul.f32 %v653, %v666
    %v668 = vadd.f32 %v667, 0.014752088
    %v669 = vmul.f32 %v653, %v668
    %v670 = vadd.f32 %v669, 0.112945676
    %v671 = vmul.f32 %v653, %v670
    %v672 = vadd.f32 %v671, 0.4994258
    %v673 = vmul.f32 %v653, %v672
    %v674 = vadd.f32 %v673, 1.0
    %v675 = vrcp.pop %v674
    %v676 = vmul.f32 %v674, %v675
    %v677 = vsub.f32 1.0, %v676
    %v678 = vmul.f32 %v675, %v677
    %v679 = vadd.f32 %v675, %v678
    %vm680 = vweird.f32 %v674
    %vm681 = vweird.f32 %v675
    %vm682 = vmor %vm680, %vm681
    %v683 = vsel %vm682, %v675, %v679
    %v684 = vand.u32 2147483647, %v674
    %vm685 = vcmp.eq.f32.partialorder %v684, 8.507059e+37
    %v686 = vand.u32 %v674, 2147483648
    %v687 = vor.u32 1.1754944e-38, %v686
    %v688 = vsel %vm685, %v687, %v683
    %v689 = vmul.f32 %v664, %v688
    %v690 = vmin.f32 %v689, 1.0
    %v691 = vmax.f32 %v690, -1.0
    %v692 = vmul.f32 %v644, %v644
    %v693 = vmin.f32 16.0, %v692
    %v694 = vmul.f32 %v693, 2.1237322e-06
    %v695 = vadd.f32 %v694, 0.00028619796
    %v696 = vmul.f32 %v693, %v695
    %v697 = vadd.f32 %v696, 0.0036580483
    %v698 = vmul.f32 %v693, %v697
    %v699 = vadd.f32 %v698, 0.05243302
    %v700 = vmul.f32 %v693, %v699
    %v701 = vadd.f32 %v700, 0.18741608
    %v702 = vmul.f32 %v693, %v701
    %v703 = vadd.f32 %v702, 1.1283791
    %v704 = vmul.f32 %v644, %v703
    %v705 = vmul.f32 %v693, 3.8918573e-05
    %v706 = vadd.f32 %v705, 0.001143296
    %v707 = vmul.f32 %v693, %v706
    %v708 = vadd.f32 %v707, 0.014752088
    %v709 = vmul.f32 %v693, %v708
    %v710 = vadd.f32 %v709, 0.112945676
    %v711 = vmul.f32 %v693, %v710
    %v712 = vadd.f32 %v711, 0.4994258
    %v713 = vmul.f32 %v693, %v712
    %v714 = vadd.f32 %v713, 1.0
    %v715 = vrcp.pop %v714
    %v716 = vmul.f32 %v714, %v715
    %v717 = vsub.f32 1.0, %v716
    %v718 = vmul.f32 %v715, %v717
    %v719 = vadd.f32 %v715, %v718
    %vm720 = vweird.f32 %v714
    %vm721 = vweird.f32 %v715
    %vm722 = vmor %vm720, %vm721
    %v723 = vsel %vm722, %v715, %v719
    %v724 = vand.u32 2147483647, %v714
    %vm725 = vcmp.eq.f32.partialorder %v724, 8.507059e+37
    %v726 = vand.u32 %v714, 2147483648
    %v727 = vor.u32 1.1754944e-38, %v726
    %v728 = vsel %vm725, %v727, %v723
    %v729 = vmul.f32 %v704, %v728
    %v730 = vmin.f32 %v729, 1.0
    %v731 = vmax.f32 %v730, -1.0
    %v732 = vmul.f32 %v647, %v647
    %v733 = vmin.f32 16.0, %v732
    %v734 = vmul.f32 %v733, 2.1237322e-06
    %v735 = vadd.f32 %v734, 0.00028619796
    %v736 = vmul.f32 %v733, %v735
    %v737 = vadd.f32 %v736, 0.0036580483
    %v738 = vmul.f32 %v733, %v737
    %v739 = vadd.f32 %v738, 0.05243302
    %v740 = vmul.f32 %v733, %v739
    %v741 = vadd.f32 %v740, 0.18741608
    %v742 = vmul.f32 %v733, %v741
    %v743 = vadd.f32 %v742, 1.1283791
    %v744 = vmul.f32 %v647, %v743
    %v745 = vmul.f32 %v733, 3.8918573e-05
    %v746 = vadd.f32 %v745, 0.001143296
    %v747 = vmul.f32 %v733, %v746
    %v748 = vadd.f32 %v747, 0.014752088
    %v749 = vmul.f32 %v733, %v748
    %v750 = vadd.f32 %v749, 0.112945676
    %v751 = vmul.f32 %v733, %v750
    %v752 = vadd.f32 %v751, 0.4994258
    %v753 = vmul.f32 %v733, %v752
    %v754 = vadd.f32 %v753, 1.0
    %v755 = vrcp.pop %v754
    %v756 = vmul.f32 %v754, %v755
    %v757 = vsub.f32 1.0, %v756
    %v758 = vmul.f32 %v755, %v757
    %v759 = vadd.f32 %v755, %v758
    %vm760 = vweird.f32 %v754
    %vm761 = vweird.f32 %v755
    %vm762 = vmor %vm760, %vm761
    %v763 = vsel %vm762, %v755, %v759
    %v764 = vand.u32 2147483647, %v754
    %vm765 = vcmp.eq.f32.partialorder %v764, 8.507059e+37
    %v766 = vand.u32 %v754, 2147483648
    %v767 = vor.u32 1.1754944e-38, %v766
    %v768 = vsel %vm765, %v767, %v763
    %v769 = vmul.f32 %v744, %v768
    %v770 = vmin.f32 %v769, 1.0
    %v771 = vmax.f32 %v770, -1.0
    %v772 = vadd.f32 %v691, 1.0
    %v773 = vadd.f32 %v731, 1.0
    %v774 = vadd.f32 %v771, 1.0
    %v775 = vmul.f32 %v649, %v772
    %v776 = vmul.f32 %v650, %v773
    %v777 = vmul.f32 %v651, %v774
    %s778 = scalar_lea.vmem %s3, 72
    %v779 = vld [vmem:[%s778] sm:$0xff]
    %v780 = vld [vmem:[%s778 + $0x8] sm:$0xff]
    %v781 = vld [vmem:[%s778 + $0x10] sm:$0xff]
    %s782 = scalar_lea.vmem %s4, 72
    %v783 = vld [vmem:[%s782] sm:$0xff]
    %v784 = vld [vmem:[%s782 + $0x8] sm:$0xff]
    %v785 = vld [vmem:[%s782 + $0x10] sm:$0xff]
    %787 = vset.pattern.permute.xlu0 0
    %788 = vperm.xlu0 %787, %v783
    %v789 = vpop.permute.xlu0 %788
    %792 = vset.pattern.permute.xlu0 0
    %793 = vperm.xlu0 %792, %v784
    %v794 = vpop.permute.xlu0 %793
    %797 = vset.pattern.permute.xlu0 0
    %798 = vperm.xlu0 %797, %v785
    %v799 = vpop.permute.xlu0 %798
    %v802 = vsel %vm239, %v779, 0
    %v805 = vsel %vm239, %v780, 0
    %v808 = vsel %vm239, %v781, 0
    %810 = vmatpush.msra.mxu0 0.0
    %811 = vmatpush.msra.mxu0 0.0
    %812 = vmatpush.msra.mxu0 0.0
    %813 = vmatpush.msra.mxu0 0.0
    %814 = vmatpush.msra.mxu0 0.0
    %815 = vmatpush.msra.mxu0 0.0
    %816 = vmatpush.msra.mxu0 0.0
    %817 = vmatpush.msra.mxu0 0.0
    %818 = vmatpush.msra.mxu0 0.0
    %819 = vmatpush.msra.mxu0 0.0
    %820 = vmatpush.msra.mxu0 0.0
    %821 = vmatpush.msra.mxu0 0.0
    %822 = vmatpush.msra.mxu0 0.0
    %823 = vmatpush.msra.mxu0 %v777
    %824 = vmatpush.msra.mxu0 %v776
    %825 = vmatpush.msra.mxu0 %v775
    %826 = vmatmul.f32.gmra.mxu0 %v802
    %v827 = vpop.f32.mrf.mxu0
    %v828 = vadd.f32 %v789, %v827
    %829 = vmatmul.f32.gmra.mxu0 %v805
    %v830 = vpop.f32.mrf.mxu0
    %v831 = vadd.f32 %v794, %v830
    %832 = vmatmul.f32.gmra.mxu0 %v808
    %v833 = vpop.f32.mrf.mxu0
    %v834 = vadd.f32 %v799, %v833
    %835 = vdwg.mxu0
    %v836 = vmul.f32 %v828, 0.70710677
    %v837 = vmul.f32 %v831, 0.70710677
    %v838 = vmul.f32 %v834, 0.70710677
    %v839 = vmul.f32 %v828, %v828
    %v840 = vmin.f32 16.0, %v839
    %v841 = vmul.f32 %v840, 2.1237322e-06
    %v842 = vadd.f32 %v841, 0.00028619796
    %v843 = vmul.f32 %v840, %v842
    %v844 = vadd.f32 %v843, 0.0036580483
    %v845 = vmul.f32 %v840, %v844
    %v846 = vadd.f32 %v845, 0.05243302
    %v847 = vmul.f32 %v840, %v846
    %v848 = vadd.f32 %v847, 0.18741608
    %v849 = vmul.f32 %v840, %v848
    %v850 = vadd.f32 %v849, 1.1283791
    %v851 = vmul.f32 %v828, %v850
    %v852 = vmul.f32 %v840, 3.8918573e-05
    %v853 = vadd.f32 %v852, 0.001143296
    %v854 = vmul.f32 %v840, %v853
    %v855 = vadd.f32 %v854, 0.014752088
    %v856 = vmul.f32 %v840, %v855
    %v857 = vadd.f32 %v856, 0.112945676
    %v858 = vmul.f32 %v840, %v857
    %v859 = vadd.f32 %v858, 0.4994258
    %v860 = vmul.f32 %v840, %v859
    %v861 = vadd.f32 %v860, 1.0
    %v862 = vrcp.pop %v861
    %v863 = vmul.f32 %v861, %v862
    %v864 = vsub.f32 1.0, %v863
    %v865 = vmul.f32 %v862, %v864
    %v866 = vadd.f32 %v862, %v865
    %vm867 = vweird.f32 %v861
    %vm868 = vweird.f32 %v862
    %vm869 = vmor %vm867, %vm868
    %v870 = vsel %vm869, %v862, %v866
    %v871 = vand.u32 2147483647, %v861
    %vm872 = vcmp.eq.f32.partialorder %v871, 8.507059e+37
    %v873 = vand.u32 %v861, 2147483648
    %v874 = vor.u32 1.1754944e-38, %v873
    %v875 = vsel %vm872, %v874, %v870
    %v876 = vmul.f32 %v851, %v875
    %v877 = vmin.f32 %v876, 1.0
    %v878 = vmax.f32 %v877, -1.0
    %v879 = vmul.f32 %v831, %v831
    %v880 = vmin.f32 16.0, %v879
    %v881 = vmul.f32 %v880, 2.1237322e-06
    %v882 = vadd.f32 %v881, 0.00028619796
    %v883 = vmul.f32 %v880, %v882
    %v884 = vadd.f32 %v883, 0.0036580483
    %v885 = vmul.f32 %v880, %v884
    %v886 = vadd.f32 %v885, 0.05243302
    %v887 = vmul.f32 %v880, %v886
    %v888 = vadd.f32 %v887, 0.18741608
    %v889 = vmul.f32 %v880, %v888
    %v890 = vadd.f32 %v889, 1.1283791
    %v891 = vmul.f32 %v831, %v890
    %v892 = vmul.f32 %v880, 3.8918573e-05
    %v893 = vadd.f32 %v892, 0.001143296
    %v894 = vmul.f32 %v880, %v893
    %v895 = vadd.f32 %v894, 0.014752088
    %v896 = vmul.f32 %v880, %v895
    %v897 = vadd.f32 %v896, 0.112945676
    %v898 = vmul.f32 %v880, %v897
    %v899 = vadd.f32 %v898, 0.4994258
    %v900 = vmul.f32 %v880, %v899
    %v901 = vadd.f32 %v900, 1.0
    %v902 = vrcp.pop %v901
    %v903 = vmul.f32 %v901, %v902
    %v904 = vsub.f32 1.0, %v903
    %v905 = vmul.f32 %v902, %v904
    %v906 = vadd.f32 %v902, %v905
    %vm907 = vweird.f32 %v901
    %vm908 = vweird.f32 %v902
    %vm909 = vmor %vm907, %vm908
    %v910 = vsel %vm909, %v902, %v906
    %v911 = vand.u32 2147483647, %v901
    %vm912 = vcmp.eq.f32.partialorder %v911, 8.507059e+37
    %v913 = vand.u32 %v901, 2147483648
    %v914 = vor.u32 1.1754944e-38, %v913
    %v915 = vsel %vm912, %v914, %v910
    %v916 = vmul.f32 %v891, %v915
    %v917 = vmin.f32 %v916, 1.0
    %v918 = vmax.f32 %v917, -1.0
    %v919 = vmul.f32 %v834, %v834
    %v920 = vmin.f32 16.0, %v919
    %v921 = vmul.f32 %v920, 2.1237322e-06
    %v922 = vadd.f32 %v921, 0.00028619796
    %v923 = vmul.f32 %v920, %v922
    %v924 = vadd.f32 %v923, 0.0036580483
    %v925 = vmul.f32 %v920, %v924
    %v926 = vadd.f32 %v925, 0.05243302
    %v927 = vmul.f32 %v920, %v926
    %v928 = vadd.f32 %v927, 0.18741608
    %v929 = vmul.f32 %v920, %v928
    %v930 = vadd.f32 %v929, 1.1283791
    %v931 = vmul.f32 %v834, %v930
    %v932 = vmul.f32 %v920, 3.8918573e-05
    %v933 = vadd.f32 %v932, 0.001143296
    %v934 = vmul.f32 %v920, %v933
    %v935 = vadd.f32 %v934, 0.014752088
    %v936 = vmul.f32 %v920, %v935
    %v937 = vadd.f32 %v936, 0.112945676
    %v938 = vmul.f32 %v920, %v937
    %v939 = vadd.f32 %v938, 0.4994258
    %v940 = vmul.f32 %v920, %v939
    %v941 = vadd.f32 %v940, 1.0
    %v942 = vrcp.pop %v941
    %v943 = vmul.f32 %v941, %v942
    %v944 = vsub.f32 1.0, %v943
    %v945 = vmul.f32 %v942, %v944
    %v946 = vadd.f32 %v942, %v945
    %vm947 = vweird.f32 %v941
    %vm948 = vweird.f32 %v942
    %vm949 = vmor %vm947, %vm948
    %v950 = vsel %vm949, %v942, %v946
    %v951 = vand.u32 2147483647, %v941
    %vm952 = vcmp.eq.f32.partialorder %v951, 8.507059e+37
    %v953 = vand.u32 %v941, 2147483648
    %v954 = vor.u32 1.1754944e-38, %v953
    %v955 = vsel %vm952, %v954, %v950
    %v956 = vmul.f32 %v931, %v955
    %v957 = vmin.f32 %v956, 1.0
    %v958 = vmax.f32 %v957, -1.0
    %v959 = vadd.f32 %v878, 1.0
    %v960 = vadd.f32 %v918, 1.0
    %v961 = vadd.f32 %v958, 1.0
    %v962 = vmul.f32 %v836, %v959
    %v963 = vmul.f32 %v837, %v960
    %v964 = vmul.f32 %v838, %v961
    %v965 = vld [vmem:[%s5] sm:$0xff]
    %v966 = vld [vmem:[%s5 + $0x8] sm:$0xff]
    %v967 = vld [vmem:[%s5 + $0x10] sm:$0xff]
    %v968 = vld [vmem:[%s5 + $0x18] sm:$0xff]
    %v969 = vld [vmem:[%s5 + $0x20] sm:$0xff]
    %v970 = vld [vmem:[%s5 + $0x28] sm:$0xff]
    %v971 = vld [vmem:[%s5 + $0x30] sm:$0xff]
    %v972 = vld [vmem:[%s5 + $0x38] sm:$0xff]
    %v973 = vld [vmem:[%s5 + $0x40] sm:$0xff]
    %v974 = vld [vmem:[%s5 + $0x48] sm:$0xff]
    %v975 = vld [vmem:[%s5 + $0x50] sm:$0xff]
    %v976 = vld [vmem:[%s5 + $0x58] sm:$0xff]
    %v977 = vld [vmem:[%s6] sm:$0x1]
    %v979 = vperm.slane %v977, 0
    %981 = vxpose.xlu0.b32.start [1/16] %v962, 128
    %982 = vxpose.xlu0.b32.cont [2/16] %v963, 128
    %983 = vxpose.xlu0.b32.cont [3/16] %v964, 128
    %984 = vxpose.xlu0.b32.cont [4/16] 0.0, 128
    %985 = vxpose.xlu0.b32.cont [5/16] 0.0, 128
    %986 = vxpose.xlu0.b32.cont [6/16] 0.0, 128
    %987 = vxpose.xlu0.b32.cont [7/16] 0.0, 128
    %988 = vxpose.xlu0.b32.cont [8/16] 0.0, 128
    %989 = vxpose.xlu0.b32.cont [9/16] 0.0, 128
    %990 = vxpose.xlu0.b32.cont [10/16] 0.0, 128
    %991 = vxpose.xlu0.b32.cont [11/16] 0.0, 128
    %992 = vxpose.xlu0.b32.cont [12/16] 0.0, 128
    %993 = vxpose.xlu0.b32.cont [13/16] 0.0, 128
    %994 = vxpose.xlu0.b32.cont [14/16] 0.0, 128
    %995 = vxpose.xlu0.b32.cont [15/16] 0.0, 128
    %996 = vxpose.xlu0.b32.end [16/16] 0.0, 128
    %v997 = vpop.trf.xlu0
    %v998 = vpop.trf.xlu0
    %v999 = vpop.trf.xlu0
    %v1000 = vpop.trf.xlu0
    %v1001 = vpop.trf.xlu0
    %v1002 = vpop.trf.xlu0
    %v1003 = vpop.trf.xlu0
    %v1004 = vpop.trf.xlu0
    %v1005 = vpop.trf.xlu0
    %v1006 = vpop.trf.xlu0
    %v1007 = vpop.trf.xlu0
    %v1008 = vpop.trf.xlu0
    %v1009 = vpop.trf.xlu0
    %v1010 = vpop.trf.xlu0
    %v1011 = vpop.trf.xlu0
    %v1012 = vpop.trf.xlu0
    %v1014 = vsel %vm239, %v997, 0
    %v1017 = vsel %vm239, %v998, 0
    %v1020 = vsel %vm239, %v999, 0
    %v1023 = vsel %vm239, %v1000, 0
    %v1026 = vsel %vm239, %v1001, 0
    %v1029 = vsel %vm239, %v1002, 0
    %v1032 = vsel %vm239, %v1003, 0
    %v1035 = vsel %vm239, %v1004, 0
    %v1038 = vsel %vm239, %v1005, 0
    %v1041 = vsel %vm239, %v1006, 0
    %v1044 = vsel %vm239, %v1007, 0
    %v1047 = vsel %vm239, %v1008, 0
    %v1050 = vsel %vm239, %v1009, 0
    %v1053 = vsel %vm239, %v1010, 0
    %v1056 = vsel %vm239, %v1011, 0
    %v1059 = vsel %vm239, %v1012, 0
    %v1062 = vsel %vm239, %v965, 0
    %v1065 = vsel %vm239, %v966, 0
    %v1068 = vsel %vm239, %v967, 0
    %v1071 = vsel %vm239, %v968, 0
    %v1074 = vsel %vm239, %v969, 0
    %v1077 = vsel %vm239, %v970, 0
    %v1080 = vsel %vm239, %v971, 0
    %v1083 = vsel %vm239, %v972, 0
    %v1086 = vsel %vm239, %v973, 0
    %v1089 = vsel %vm239, %v974, 0
    %v1092 = vsel %vm239, %v975, 0
    %v1095 = vsel %vm239, %v976, 0
    %1097 = vmatpush.xpose.msra.mxu0 0.0
    %1098 = vmatpush.xpose.msra.mxu0 0.0
    %1099 = vmatpush.xpose.msra.mxu0 0.0
    %1100 = vmatpush.xpose.msra.mxu0 0.0
    %1101 = vmatpush.xpose.msra.mxu0 %v1095
    %1102 = vmatpush.xpose.msra.mxu0 %v1092
    %1103 = vmatpush.xpose.msra.mxu0 %v1089
    %1104 = vmatpush.xpose.msra.mxu0 %v1086
    %1105 = vmatpush.xpose.msra.mxu0 %v1083
    %1106 = vmatpush.xpose.msra.mxu0 %v1080
    %1107 = vmatpush.xpose.msra.mxu0 %v1077
    %1108 = vmatpush.xpose.msra.mxu0 %v1074
    %1109 = vmatpush.xpose.msra.mxu0 %v1071
    %1110 = vmatpush.xpose.msra.mxu0 %v1068
    %1111 = vmatpush.xpose.msra.mxu0 %v1065
    %1112 = vmatpush.xpose.msra.mxu0 %v1062
    %1113 = vmatmul.f32.gmra.mxu0 %v1014
    %v1114 = vpop.f32.mrf.mxu0
    %v1115 = vadd.f32 %v979, %v1114
    %1116 = vmatmul.f32.gmra.mxu0 %v1017
    %v1117 = vpop.f32.mrf.mxu0
    %v1118 = vadd.f32 %v979, %v1117
    %1119 = vmatmul.f32.gmra.mxu0 %v1020
    %v1120 = vpop.f32.mrf.mxu0
    %v1121 = vadd.f32 %v979, %v1120
    %1122 = vmatmul.f32.gmra.mxu0 %v1023
    %v1123 = vpop.f32.mrf.mxu0
    %v1124 = vadd.f32 %v979, %v1123
    %1125 = vmatmul.f32.gmra.mxu0 %v1026
    %v1126 = vpop.f32.mrf.mxu0
    %v1127 = vadd.f32 %v979, %v1126
    %1128 = vmatmul.f32.gmra.mxu0 %v1029
    %v1129 = vpop.f32.mrf.mxu0
    %v1130 = vadd.f32 %v979, %v1129
    %1131 = vmatmul.f32.gmra.mxu0 %v1032
    %v1132 = vpop.f32.mrf.mxu0
    %v1133 = vadd.f32 %v979, %v1132
    %1134 = vmatmul.f32.gmra.mxu0 %v1035
    %v1135 = vpop.f32.mrf.mxu0
    %v1136 = vadd.f32 %v979, %v1135
    %1137 = vmatmul.f32.gmra.mxu0 %v1038
    %v1138 = vpop.f32.mrf.mxu0
    %v1139 = vadd.f32 %v979, %v1138
    %1140 = vmatmul.f32.gmra.mxu0 %v1041
    %v1141 = vpop.f32.mrf.mxu0
    %v1142 = vadd.f32 %v979, %v1141
    %1143 = vmatmul.f32.gmra.mxu0 %v1044
    %v1144 = vpop.f32.mrf.mxu0
    %v1145 = vadd.f32 %v979, %v1144
    %1146 = vmatmul.f32.gmra.mxu0 %v1047
    %v1147 = vpop.f32.mrf.mxu0
    %v1148 = vadd.f32 %v979, %v1147
    %1149 = vmatmul.f32.gmra.mxu0 %v1050
    %v1150 = vpop.f32.mrf.mxu0
    %v1151 = vadd.f32 %v979, %v1150
    %1152 = vmatmul.f32.gmra.mxu0 %v1053
    %v1153 = vpop.f32.mrf.mxu0
    %v1154 = vadd.f32 %v979, %v1153
    %1155 = vmatmul.f32.gmra.mxu0 %v1056
    %v1156 = vpop.f32.mrf.mxu0
    %v1157 = vadd.f32 %v979, %v1156
    %1158 = vmatmul.f32.gmra.mxu0 %v1059
    %v1159 = vpop.f32.mrf.mxu0
    %v1160 = vadd.f32 %v979, %v1159
    %1161 = vdwg.mxu0
    %v1162 = vmul.f32 %v1115, 0.70710677
    %v1163 = vmul.f32 %v1118, 0.70710677
    %v1164 = vmul.f32 %v1121, 0.70710677
    %v1165 = vmul.f32 %v1124, 0.70710677
    %v1166 = vmul.f32 %v1127, 0.70710677
    %v1167 = vmul.f32 %v1130, 0.70710677
    %v1168 = vmul.f32 %v1133, 0.70710677
    %v1169 = vmul.f32 %v1136, 0.70710677
    %v1170 = vmul.f32 %v1139, 0.70710677
    %v1171 = vmul.f32 %v1142, 0.70710677
    %v1172 = vmul.f32 %v1145, 0.70710677
    %v1173 = vmul.f32 %v1148, 0.70710677
    %v1174 = vmul.f32 %v1151, 0.70710677
    %v1175 = vmul.f32 %v1154, 0.70710677
    %v1176 = vmul.f32 %v1157, 0.70710677
    %v1177 = vmul.f32 %v1160, 0.70710677
    %v1178 = vmul.f32 %v1115, %v1115
    %v1179 = vmin.f32 16.0, %v1178
    %v1180 = vmul.f32 %v1179, 2.1237322e-06
    %v1181 = vadd.f32 %v1180, 0.00028619796
    %v1182 = vmul.f32 %v1179, %v1181
    %v1183 = vadd.f32 %v1182, 0.0036580483
    %v1184 = vmul.f32 %v1179, %v1183
    %v1185 = vadd.f32 %v1184, 0.05243302
    %v1186 = vmul.f32 %v1179, %v1185
    %v1187 = vadd.f32 %v1186, 0.18741608
    %v1188 = vmul.f32 %v1179, %v1187
    %v1189 = vadd.f32 %v1188, 1.1283791
    %v1190 = vmul.f32 %v1115, %v1189
    %v1191 = vmul.f32 %v1179, 3.8918573e-05
    %v1192 = vadd.f32 %v1191, 0.001143296
    %v1193 = vmul.f32 %v1179, %v1192
    %v1194 = vadd.f32 %v1193, 0.014752088
    %v1195 = vmul.f32 %v1179, %v1194
    %v1196 = vadd.f32 %v1195, 0.112945676
    %v1197 = vmul.f32 %v1179, %v1196
    %v1198 = vadd.f32 %v1197, 0.4994258
    %v1199 = vmul.f32 %v1179, %v1198
    %v1200 = vadd.f32 %v1199, 1.0
    %v1201 = vrcp.pop %v1200
    %v1202 = vmul.f32 %v1200, %v1201
    %v1203 = vsub.f32 1.0, %v1202
    %v1204 = vmul.f32 %v1201, %v1203
    %v1205 = vadd.f32 %v1201, %v1204
    %vm1206 = vweird.f32 %v1200
    %vm1207 = vweird.f32 %v1201
    %vm1208 = vmor %vm1206, %vm1207
    %v1209 = vsel %vm1208, %v1201, %v1205
    %v1210 = vand.u32 2147483647, %v1200
    %vm1211 = vcmp.eq.f32.partialorder %v1210, 8.507059e+37
    %v1212 = vand.u32 %v1200, 2147483648
    %v1213 = vor.u32 1.1754944e-38, %v1212
    %v1214 = vsel %vm1211, %v1213, %v1209
    %v1215 = vmul.f32 %v1190, %v1214
    %v1216 = vmin.f32 %v1215, 1.0
    %v1217 = vmax.f32 %v1216, -1.0
    %v1218 = vmul.f32 %v1118, %v1118
    %v1219 = vmin.f32 16.0, %v1218
    %v1220 = vmul.f32 %v1219, 2.1237322e-06
    %v1221 = vadd.f32 %v1220, 0.00028619796
    %v1222 = vmul.f32 %v1219, %v1221
    %v1223 = vadd.f32 %v1222, 0.0036580483
    %v1224 = vmul.f32 %v1219, %v1223
    %v1225 = vadd.f32 %v1224, 0.05243302
    %v1226 = vmul.f32 %v1219, %v1225
    %v1227 = vadd.f32 %v1226, 0.18741608
    %v1228 = vmul.f32 %v1219, %v1227
    %v1229 = vadd.f32 %v1228, 1.1283791
    %v1230 = vmul.f32 %v1118, %v1229
    %v1231 = vmul.f32 %v1219, 3.8918573e-05
    %v1232 = vadd.f32 %v1231, 0.001143296
    %v1233 = vmul.f32 %v1219, %v1232
    %v1234 = vadd.f32 %v1233, 0.014752088
    %v1235 = vmul.f32 %v1219, %v1234
    %v1236 = vadd.f32 %v1235, 0.112945676
    %v1237 = vmul.f32 %v1219, %v1236
    %v1238 = vadd.f32 %v1237, 0.4994258
    %v1239 = vmul.f32 %v1219, %v1238
    %v1240 = vadd.f32 %v1239, 1.0
    %v1241 = vrcp.pop %v1240
    %v1242 = vmul.f32 %v1240, %v1241
    %v1243 = vsub.f32 1.0, %v1242
    %v1244 = vmul.f32 %v1241, %v1243
    %v1245 = vadd.f32 %v1241, %v1244
    %vm1246 = vweird.f32 %v1240
    %vm1247 = vweird.f32 %v1241
    %vm1248 = vmor %vm1246, %vm1247
    %v1249 = vsel %vm1248, %v1241, %v1245
    %v1250 = vand.u32 2147483647, %v1240
    %vm1251 = vcmp.eq.f32.partialorder %v1250, 8.507059e+37
    %v1252 = vand.u32 %v1240, 2147483648
    %v1253 = vor.u32 1.1754944e-38, %v1252
    %v1254 = vsel %vm1251, %v1253, %v1249
    %v1255 = vmul.f32 %v1230, %v1254
    %v1256 = vmin.f32 %v1255, 1.0
    %v1257 = vmax.f32 %v1256, -1.0
    %v1258 = vmul.f32 %v1121, %v1121
    %v1259 = vmin.f32 16.0, %v1258
    %v1260 = vmul.f32 %v1259, 2.1237322e-06
    %v1261 = vadd.f32 %v1260, 0.00028619796
    %v1262 = vmul.f32 %v1259, %v1261
    %v1263 = vadd.f32 %v1262, 0.0036580483
    %v1264 = vmul.f32 %v1259, %v1263
    %v1265 = vadd.f32 %v1264, 0.05243302
    %v1266 = vmul.f32 %v1259, %v1265
    %v1267 = vadd.f32 %v1266, 0.18741608
    %v1268 = vmul.f32 %v1259, %v1267
    %v1269 = vadd.f32 %v1268, 1.1283791
    %v1270 = vmul.f32 %v1121, %v1269
    %v1271 = vmul.f32 %v1259, 3.8918573e-05
    %v1272 = vadd.f32 %v1271, 0.001143296
    %v1273 = vmul.f32 %v1259, %v1272
    %v1274 = vadd.f32 %v1273, 0.014752088
    %v1275 = vmul.f32 %v1259, %v1274
    %v1276 = vadd.f32 %v1275, 0.112945676
    %v1277 = vmul.f32 %v1259, %v1276
    %v1278 = vadd.f32 %v1277, 0.4994258
    %v1279 = vmul.f32 %v1259, %v1278
    %v1280 = vadd.f32 %v1279, 1.0
    %v1281 = vrcp.pop %v1280
    %v1282 = vmul.f32 %v1280, %v1281
    %v1283 = vsub.f32 1.0, %v1282
    %v1284 = vmul.f32 %v1281, %v1283
    %v1285 = vadd.f32 %v1281, %v1284
    %vm1286 = vweird.f32 %v1280
    %vm1287 = vweird.f32 %v1281
    %vm1288 = vmor %vm1286, %vm1287
    %v1289 = vsel %vm1288, %v1281, %v1285
    %v1290 = vand.u32 2147483647, %v1280
    %vm1291 = vcmp.eq.f32.partialorder %v1290, 8.507059e+37
    %v1292 = vand.u32 %v1280, 2147483648
    %v1293 = vor.u32 1.1754944e-38, %v1292
    %v1294 = vsel %vm1291, %v1293, %v1289
    %v1295 = vmul.f32 %v1270, %v1294
    %v1296 = vmin.f32 %v1295, 1.0
    %v1297 = vmax.f32 %v1296, -1.0
    %v1298 = vmul.f32 %v1124, %v1124
    %v1299 = vmin.f32 16.0, %v1298
    %v1300 = vmul.f32 %v1299, 2.1237322e-06
    %v1301 = vadd.f32 %v1300, 0.00028619796
    %v1302 = vmul.f32 %v1299, %v1301
    %v1303 = vadd.f32 %v1302, 0.0036580483
    %v1304 = vmul.f32 %v1299, %v1303
    %v1305 = vadd.f32 %v1304, 0.05243302
    %v1306 = vmul.f32 %v1299, %v1305
    %v1307 = vadd.f32 %v1306, 0.18741608
    %v1308 = vmul.f32 %v1299, %v1307
    %v1309 = vadd.f32 %v1308, 1.1283791
    %v1310 = vmul.f32 %v1124, %v1309
    %v1311 = vmul.f32 %v1299, 3.8918573e-05
    %v1312 = vadd.f32 %v1311, 0.001143296
    %v1313 = vmul.f32 %v1299, %v1312
    %v1314 = vadd.f32 %v1313, 0.014752088
    %v1315 = vmul.f32 %v1299, %v1314
    %v1316 = vadd.f32 %v1315, 0.112945676
    %v1317 = vmul.f32 %v1299, %v1316
    %v1318 = vadd.f32 %v1317, 0.4994258
    %v1319 = vmul.f32 %v1299, %v1318
    %v1320 = vadd.f32 %v1319, 1.0
    %v1321 = vrcp.pop %v1320
    %v1322 = vmul.f32 %v1320, %v1321
    %v1323 = vsub.f32 1.0, %v1322
    %v1324 = vmul.f32 %v1321, %v1323
    %v1325 = vadd.f32 %v1321, %v1324
    %vm1326 = vweird.f32 %v1320
    %vm1327 = vweird.f32 %v1321
    %vm1328 = vmor %vm1326, %vm1327
    %v1329 = vsel %vm1328, %v1321, %v1325
    %v1330 = vand.u32 2147483647, %v1320
    %vm1331 = vcmp.eq.f32.partialorder %v1330, 8.507059e+37
    %v1332 = vand.u32 %v1320, 2147483648
    %v1333 = vor.u32 1.1754944e-38, %v1332
    %v1334 = vsel %vm1331, %v1333, %v1329
    %v1335 = vmul.f32 %v1310, %v1334
    %v1336 = vmin.f32 %v1335, 1.0
    %v1337 = vmax.f32 %v1336, -1.0
    %v1338 = vmul.f32 %v1127, %v1127
    %v1339 = vmin.f32 16.0, %v1338
    %v1340 = vmul.f32 %v1339, 2.1237322e-06
    %v1341 = vadd.f32 %v1340, 0.00028619796
    %v1342 = vmul.f32 %v1339, %v1341
    %v1343 = vadd.f32 %v1342, 0.0036580483
    %v1344 = vmul.f32 %v1339, %v1343
    %v1345 = vadd.f32 %v1344, 0.05243302
    %v1346 = vmul.f32 %v1339, %v1345
    %v1347 = vadd.f32 %v1346, 0.18741608
    %v1348 = vmul.f32 %v1339, %v1347
    %v1349 = vadd.f32 %v1348, 1.1283791
    %v1350 = vmul.f32 %v1127, %v1349
    %v1351 = vmul.f32 %v1339, 3.8918573e-05
    %v1352 = vadd.f32 %v1351, 0.001143296
    %v1353 = vmul.f32 %v1339, %v1352
    %v1354 = vadd.f32 %v1353, 0.014752088
    %v1355 = vmul.f32 %v1339, %v1354
    %v1356 = vadd.f32 %v1355, 0.112945676
    %v1357 = vmul.f32 %v1339, %v1356
    %v1358 = vadd.f32 %v1357, 0.4994258
    %v1359 = vmul.f32 %v1339, %v1358
    %v1360 = vadd.f32 %v1359, 1.0
    %v1361 = vrcp.pop %v1360
    %v1362 = vmul.f32 %v1360, %v1361
    %v1363 = vsub.f32 1.0, %v1362
    %v1364 = vmul.f32 %v1361, %v1363
    %v1365 = vadd.f32 %v1361, %v1364
    %vm1366 = vweird.f32 %v1360
    %vm1367 = vweird.f32 %v1361
    %vm1368 = vmor %vm1366, %vm1367
    %v1369 = vsel %vm1368, %v1361, %v1365
    %v1370 = vand.u32 2147483647, %v1360
    %vm1371 = vcmp.eq.f32.partialorder %v1370, 8.507059e+37
    %v1372 = vand.u32 %v1360, 2147483648
    %v1373 = vor.u32 1.1754944e-38, %v1372
    %v1374 = vsel %vm1371, %v1373, %v1369
    %v1375 = vmul.f32 %v1350, %v1374
    %v1376 = vmin.f32 %v1375, 1.0
    %v1377 = vmax.f32 %v1376, -1.0
    %v1378 = vmul.f32 %v1130, %v1130
    %v1379 = vmin.f32 16.0, %v1378
    %v1380 = vmul.f32 %v1379, 2.1237322e-06
    %v1381 = vadd.f32 %v1380, 0.00028619796
    %v1382 = vmul.f32 %v1379, %v1381
    %v1383 = vadd.f32 %v1382, 0.0036580483
    %v1384 = vmul.f32 %v1379, %v1383
    %v1385 = vadd.f32 %v1384, 0.05243302
    %v1386 = vmul.f32 %v1379, %v1385
    %v1387 = vadd.f32 %v1386, 0.18741608
    %v1388 = vmul.f32 %v1379, %v1387
    %v1389 = vadd.f32 %v1388, 1.1283791
    %v1390 = vmul.f32 %v1130, %v1389
    %v1391 = vmul.f32 %v1379, 3.8918573e-05
    %v1392 = vadd.f32 %v1391, 0.001143296
    %v1393 = vmul.f32 %v1379, %v1392
    %v1394 = vadd.f32 %v1393, 0.014752088
    %v1395 = vmul.f32 %v1379, %v1394
    %v1396 = vadd.f32 %v1395, 0.112945676
    %v1397 = vmul.f32 %v1379, %v1396
    %v1398 = vadd.f32 %v1397, 0.4994258
    %v1399 = vmul.f32 %v1379, %v1398
    %v1400 = vadd.f32 %v1399, 1.0
    %v1401 = vrcp.pop %v1400
    %v1402 = vmul.f32 %v1400, %v1401
    %v1403 = vsub.f32 1.0, %v1402
    %v1404 = vmul.f32 %v1401, %v1403
    %v1405 = vadd.f32 %v1401, %v1404
    %vm1406 = vweird.f32 %v1400
    %vm1407 = vweird.f32 %v1401
    %vm1408 = vmor %vm1406, %vm1407
    %v1409 = vsel %vm1408, %v1401, %v1405
    %v1410 = vand.u32 2147483647, %v1400
    %vm1411 = vcmp.eq.f32.partialorder %v1410, 8.507059e+37
    %v1412 = vand.u32 %v1400, 2147483648
    %v1413 = vor.u32 1.1754944e-38, %v1412
    %v1414 = vsel %vm1411, %v1413, %v1409
    %v1415 = vmul.f32 %v1390, %v1414
    %v1416 = vmin.f32 %v1415, 1.0
    %v1417 = vmax.f32 %v1416, -1.0
    %v1418 = vmul.f32 %v1133, %v1133
    %v1419 = vmin.f32 16.0, %v1418
    %v1420 = vmul.f32 %v1419, 2.1237322e-06
    %v1421 = vadd.f32 %v1420, 0.00028619796
    %v1422 = vmul.f32 %v1419, %v1421
    %v1423 = vadd.f32 %v1422, 0.0036580483
    %v1424 = vmul.f32 %v1419, %v1423
    %v1425 = vadd.f32 %v1424, 0.05243302
    %v1426 = vmul.f32 %v1419, %v1425
    %v1427 = vadd.f32 %v1426, 0.18741608
    %v1428 = vmul.f32 %v1419, %v1427
    %v1429 = vadd.f32 %v1428, 1.1283791
    %v1430 = vmul.f32 %v1133, %v1429
    %v1431 = vmul.f32 %v1419, 3.8918573e-05
    %v1432 = vadd.f32 %v1431, 0.001143296
    %v1433 = vmul.f32 %v1419, %v1432
    %v1434 = vadd.f32 %v1433, 0.014752088
    %v1435 = vmul.f32 %v1419, %v1434
    %v1436 = vadd.f32 %v1435, 0.112945676
    %v1437 = vmul.f32 %v1419, %v1436
    %v1438 = vadd.f32 %v1437, 0.4994258
    %v1439 = vmul.f32 %v1419, %v1438
    %v1440 = vadd.f32 %v1439, 1.0
    %v1441 = vrcp.pop %v1440
    %v1442 = vmul.f32 %v1440, %v1441
    %v1443 = vsub.f32 1.0, %v1442
    %v1444 = vmul.f32 %v1441, %v1443
    %v1445 = vadd.f32 %v1441, %v1444
    %vm1446 = vweird.f32 %v1440
    %vm1447 = vweird.f32 %v1441
    %vm1448 = vmor %vm1446, %vm1447
    %v1449 = vsel %vm1448, %v1441, %v1445
    %v1450 = vand.u32 2147483647, %v1440
    %vm1451 = vcmp.eq.f32.partialorder %v1450, 8.507059e+37
    %v1452 = vand.u32 %v1440, 2147483648
    %v1453 = vor.u32 1.1754944e-38, %v1452
    %v1454 = vsel %vm1451, %v1453, %v1449
    %v1455 = vmul.f32 %v1430, %v1454
    %v1456 = vmin.f32 %v1455, 1.0
    %v1457 = vmax.f32 %v1456, -1.0
    %v1458 = vmul.f32 %v1136, %v1136
    %v1459 = vmin.f32 16.0, %v1458
    %v1460 = vmul.f32 %v1459, 2.1237322e-06
    %v1461 = vadd.f32 %v1460, 0.00028619796
    %v1462 = vmul.f32 %v1459, %v1461
    %v1463 = vadd.f32 %v1462, 0.0036580483
    %v1464 = vmul.f32 %v1459, %v1463
    %v1465 = vadd.f32 %v1464, 0.05243302
    %v1466 = vmul.f32 %v1459, %v1465
    %v1467 = vadd.f32 %v1466, 0.18741608
    %v1468 = vmul.f32 %v1459, %v1467
    %v1469 = vadd.f32 %v1468, 1.1283791
    %v1470 = vmul.f32 %v1136, %v1469
    %v1471 = vmul.f32 %v1459, 3.8918573e-05
    %v1472 = vadd.f32 %v1471, 0.001143296
    %v1473 = vmul.f32 %v1459, %v1472
    %v1474 = vadd.f32 %v1473, 0.014752088
    %v1475 = vmul.f32 %v1459, %v1474
    %v1476 = vadd.f32 %v1475, 0.112945676
    %v1477 = vmul.f32 %v1459, %v1476
    %v1478 = vadd.f32 %v1477, 0.4994258
    %v1479 = vmul.f32 %v1459, %v1478
    %v1480 = vadd.f32 %v1479, 1.0
    %v1481 = vrcp.pop %v1480
    %v1482 = vmul.f32 %v1480, %v1481
    %v1483 = vsub.f32 1.0, %v1482
    %v1484 = vmul.f32 %v1481, %v1483
    %v1485 = vadd.f32 %v1481, %v1484
    %vm1486 = vweird.f32 %v1480
    %vm1487 = vweird.f32 %v1481
    %vm1488 = vmor %vm1486, %vm1487
    %v1489 = vsel %vm1488, %v1481, %v1485
    %v1490 = vand.u32 2147483647, %v1480
    %vm1491 = vcmp.eq.f32.partialorder %v1490, 8.507059e+37
    %v1492 = vand.u32 %v1480, 2147483648
    %v1493 = vor.u32 1.1754944e-38, %v1492
    %v1494 = vsel %vm1491, %v1493, %v1489
    %v1495 = vmul.f32 %v1470, %v1494
    %v1496 = vmin.f32 %v1495, 1.0
    %v1497 = vmax.f32 %v1496, -1.0
    %v1498 = vmul.f32 %v1139, %v1139
    %v1499 = vmin.f32 16.0, %v1498
    %v1500 = vmul.f32 %v1499, 2.1237322e-06
    %v1501 = vadd.f32 %v1500, 0.00028619796
    %v1502 = vmul.f32 %v1499, %v1501
    %v1503 = vadd.f32 %v1502, 0.0036580483
    %v1504 = vmul.f32 %v1499, %v1503
    %v1505 = vadd.f32 %v1504, 0.05243302
    %v1506 = vmul.f32 %v1499, %v1505
    %v1507 = vadd.f32 %v1506, 0.18741608
    %v1508 = vmul.f32 %v1499, %v1507
    %v1509 = vadd.f32 %v1508, 1.1283791
    %v1510 = vmul.f32 %v1139, %v1509
    %v1511 = vmul.f32 %v1499, 3.8918573e-05
    %v1512 = vadd.f32 %v1511, 0.001143296
    %v1513 = vmul.f32 %v1499, %v1512
    %v1514 = vadd.f32 %v1513, 0.014752088
    %v1515 = vmul.f32 %v1499, %v1514
    %v1516 = vadd.f32 %v1515, 0.112945676
    %v1517 = vmul.f32 %v1499, %v1516
    %v1518 = vadd.f32 %v1517, 0.4994258
    %v1519 = vmul.f32 %v1499, %v1518
    %v1520 = vadd.f32 %v1519, 1.0
    %v1521 = vrcp.pop %v1520
    %v1522 = vmul.f32 %v1520, %v1521
    %v1523 = vsub.f32 1.0, %v1522
    %v1524 = vmul.f32 %v1521, %v1523
    %v1525 = vadd.f32 %v1521, %v1524
    %vm1526 = vweird.f32 %v1520
    %vm1527 = vweird.f32 %v1521
    %vm1528 = vmor %vm1526, %vm1527
    %v1529 = vsel %vm1528, %v1521, %v1525
    %v1530 = vand.u32 2147483647, %v1520
    %vm1531 = vcmp.eq.f32.partialorder %v1530, 8.507059e+37
    %v1532 = vand.u32 %v1520, 2147483648
    %v1533 = vor.u32 1.1754944e-38, %v1532
    %v1534 = vsel %vm1531, %v1533, %v1529
    %v1535 = vmul.f32 %v1510, %v1534
    %v1536 = vmin.f32 %v1535, 1.0
    %v1537 = vmax.f32 %v1536, -1.0
    %v1538 = vmul.f32 %v1142, %v1142
    %v1539 = vmin.f32 16.0, %v1538
    %v1540 = vmul.f32 %v1539, 2.1237322e-06
    %v1541 = vadd.f32 %v1540, 0.00028619796
    %v1542 = vmul.f32 %v1539, %v1541
    %v1543 = vadd.f32 %v1542, 0.0036580483
    %v1544 = vmul.f32 %v1539, %v1543
    %v1545 = vadd.f32 %v1544, 0.05243302
    %v1546 = vmul.f32 %v1539, %v1545
    %v1547 = vadd.f32 %v1546, 0.18741608
    %v1548 = vmul.f32 %v1539, %v1547
    %v1549 = vadd.f32 %v1548, 1.1283791
    %v1550 = vmul.f32 %v1142, %v1549
    %v1551 = vmul.f32 %v1539, 3.8918573e-05
    %v1552 = vadd.f32 %v1551, 0.001143296
    %v1553 = vmul.f32 %v1539, %v1552
    %v1554 = vadd.f32 %v1553, 0.014752088
    %v1555 = vmul.f32 %v1539, %v1554
    %v1556 = vadd.f32 %v1555, 0.112945676
    %v1557 = vmul.f32 %v1539, %v1556
    %v1558 = vadd.f32 %v1557, 0.4994258
    %v1559 = vmul.f32 %v1539, %v1558
    %v1560 = vadd.f32 %v1559, 1.0
    %v1561 = vrcp.pop %v1560
    %v1562 = vmul.f32 %v1560, %v1561
    %v1563 = vsub.f32 1.0, %v1562
    %v1564 = vmul.f32 %v1561, %v1563
    %v1565 = vadd.f32 %v1561, %v1564
    %vm1566 = vweird.f32 %v1560
    %vm1567 = vweird.f32 %v1561
    %vm1568 = vmor %vm1566, %vm1567
    %v1569 = vsel %vm1568, %v1561, %v1565
    %v1570 = vand.u32 2147483647, %v1560
    %vm1571 = vcmp.eq.f32.partialorder %v1570, 8.507059e+37
    %v1572 = vand.u32 %v1560, 2147483648
    %v1573 = vor.u32 1.1754944e-38, %v1572
    %v1574 = vsel %vm1571, %v1573, %v1569
    %v1575 = vmul.f32 %v1550, %v1574
    %v1576 = vmin.f32 %v1575, 1.0
    %v1577 = vmax.f32 %v1576, -1.0
    %v1578 = vmul.f32 %v1145, %v1145
    %v1579 = vmin.f32 16.0, %v1578
    %v1580 = vmul.f32 %v1579, 2.1237322e-06
    %v1581 = vadd.f32 %v1580, 0.00028619796
    %v1582 = vmul.f32 %v1579, %v1581
    %v1583 = vadd.f32 %v1582, 0.0036580483
    %v1584 = vmul.f32 %v1579, %v1583
    %v1585 = vadd.f32 %v1584, 0.05243302
    %v1586 = vmul.f32 %v1579, %v1585
    %v1587 = vadd.f32 %v1586, 0.18741608
    %v1588 = vmul.f32 %v1579, %v1587
    %v1589 = vadd.f32 %v1588, 1.1283791
    %v1590 = vmul.f32 %v1145, %v1589
    %v1591 = vmul.f32 %v1579, 3.8918573e-05
    %v1592 = vadd.f32 %v1591, 0.001143296
    %v1593 = vmul.f32 %v1579, %v1592
    %v1594 = vadd.f32 %v1593, 0.014752088
    %v1595 = vmul.f32 %v1579, %v1594
    %v1596 = vadd.f32 %v1595, 0.112945676
    %v1597 = vmul.f32 %v1579, %v1596
    %v1598 = vadd.f32 %v1597, 0.4994258
    %v1599 = vmul.f32 %v1579, %v1598
    %v1600 = vadd.f32 %v1599, 1.0
    %v1601 = vrcp.pop %v1600
    %v1602 = vmul.f32 %v1600, %v1601
    %v1603 = vsub.f32 1.0, %v1602
    %v1604 = vmul.f32 %v1601, %v1603
    %v1605 = vadd.f32 %v1601, %v1604
    %vm1606 = vweird.f32 %v1600
    %vm1607 = vweird.f32 %v1601
    %vm1608 = vmor %vm1606, %vm1607
    %v1609 = vsel %vm1608, %v1601, %v1605
    %v1610 = vand.u32 2147483647, %v1600
    %vm1611 = vcmp.eq.f32.partialorder %v1610, 8.507059e+37
    %v1612 = vand.u32 %v1600, 2147483648
    %v1613 = vor.u32 1.1754944e-38, %v1612
    %v1614 = vsel %vm1611, %v1613, %v1609
    %v1615 = vmul.f32 %v1590, %v1614
    %v1616 = vmin.f32 %v1615, 1.0
    %v1617 = vmax.f32 %v1616, -1.0
    %v1618 = vmul.f32 %v1148, %v1148
    %v1619 = vmin.f32 16.0, %v1618
    %v1620 = vmul.f32 %v1619, 2.1237322e-06
    %v1621 = vadd.f32 %v1620, 0.00028619796
    %v1622 = vmul.f32 %v1619, %v1621
    %v1623 = vadd.f32 %v1622, 0.0036580483
    %v1624 = vmul.f32 %v1619, %v1623
    %v1625 = vadd.f32 %v1624, 0.05243302
    %v1626 = vmul.f32 %v1619, %v1625
    %v1627 = vadd.f32 %v1626, 0.18741608
    %v1628 = vmul.f32 %v1619, %v1627
    %v1629 = vadd.f32 %v1628, 1.1283791
    %v1630 = vmul.f32 %v1148, %v1629
    %v1631 = vmul.f32 %v1619, 3.8918573e-05
    %v1632 = vadd.f32 %v1631, 0.001143296
    %v1633 = vmul.f32 %v1619, %v1632
    %v1634 = vadd.f32 %v1633, 0.014752088
    %v1635 = vmul.f32 %v1619, %v1634
    %v1636 = vadd.f32 %v1635, 0.112945676
    %v1637 = vmul.f32 %v1619, %v1636
    %v1638 = vadd.f32 %v1637, 0.4994258
    %v1639 = vmul.f32 %v1619, %v1638
    %v1640 = vadd.f32 %v1639, 1.0
    %v1641 = vrcp.pop %v1640
    %v1642 = vmul.f32 %v1640, %v1641
    %v1643 = vsub.f32 1.0, %v1642
    %v1644 = vmul.f32 %v1641, %v1643
    %v1645 = vadd.f32 %v1641, %v1644
    %vm1646 = vweird.f32 %v1640
    %vm1647 = vweird.f32 %v1641
    %vm1648 = vmor %vm1646, %vm1647
    %v1649 = vsel %vm1648, %v1641, %v1645
    %v1650 = vand.u32 2147483647, %v1640
    %vm1651 = vcmp.eq.f32.partialorder %v1650, 8.507059e+37
    %v1652 = vand.u32 %v1640, 2147483648
    %v1653 = vor.u32 1.1754944e-38, %v1652
    %v1654 = vsel %vm1651, %v1653, %v1649
    %v1655 = vmul.f32 %v1630, %v1654
    %v1656 = vmin.f32 %v1655, 1.0
    %v1657 = vmax.f32 %v1656, -1.0
    %v1658 = vmul.f32 %v1151, %v1151
    %v1659 = vmin.f32 16.0, %v1658
    %v1660 = vmul.f32 %v1659, 2.1237322e-06
    %v1661 = vadd.f32 %v1660, 0.00028619796
    %v1662 = vmul.f32 %v1659, %v1661
    %v1663 = vadd.f32 %v1662, 0.0036580483
    %v1664 = vmul.f32 %v1659, %v1663
    %v1665 = vadd.f32 %v1664, 0.05243302
    %v1666 = vmul.f32 %v1659, %v1665
    %v1667 = vadd.f32 %v1666, 0.18741608
    %v1668 = vmul.f32 %v1659, %v1667
    %v1669 = vadd.f32 %v1668, 1.1283791
    %v1670 = vmul.f32 %v1151, %v1669
    %v1671 = vmul.f32 %v1659, 3.8918573e-05
    %v1672 = vadd.f32 %v1671, 0.001143296
    %v1673 = vmul.f32 %v1659, %v1672
    %v1674 = vadd.f32 %v1673, 0.014752088
    %v1675 = vmul.f32 %v1659, %v1674
    %v1676 = vadd.f32 %v1675, 0.112945676
    %v1677 = vmul.f32 %v1659, %v1676
    %v1678 = vadd.f32 %v1677, 0.4994258
    %v1679 = vmul.f32 %v1659, %v1678
    %v1680 = vadd.f32 %v1679, 1.0
    %v1681 = vrcp.pop %v1680
    %v1682 = vmul.f32 %v1680, %v1681
    %v1683 = vsub.f32 1.0, %v1682
    %v1684 = vmul.f32 %v1681, %v1683
    %v1685 = vadd.f32 %v1681, %v1684
    %vm1686 = vweird.f32 %v1680
    %vm1687 = vweird.f32 %v1681
    %vm1688 = vmor %vm1686, %vm1687
    %v1689 = vsel %vm1688, %v1681, %v1685
    %v1690 = vand.u32 2147483647, %v1680
    %vm1691 = vcmp.eq.f32.partialorder %v1690, 8.507059e+37
    %v1692 = vand.u32 %v1680, 2147483648
    %v1693 = vor.u32 1.1754944e-38, %v1692
    %v1694 = vsel %vm1691, %v1693, %v1689
    %v1695 = vmul.f32 %v1670, %v1694
    %v1696 = vmin.f32 %v1695, 1.0
    %v1697 = vmax.f32 %v1696, -1.0
    %v1698 = vmul.f32 %v1154, %v1154
    %v1699 = vmin.f32 16.0, %v1698
    %v1700 = vmul.f32 %v1699, 2.1237322e-06
    %v1701 = vadd.f32 %v1700, 0.00028619796
    %v1702 = vmul.f32 %v1699, %v1701
    %v1703 = vadd.f32 %v1702, 0.0036580483
    %v1704 = vmul.f32 %v1699, %v1703
    %v1705 = vadd.f32 %v1704, 0.05243302
    %v1706 = vmul.f32 %v1699, %v1705
    %v1707 = vadd.f32 %v1706, 0.18741608
    %v1708 = vmul.f32 %v1699, %v1707
    %v1709 = vadd.f32 %v1708, 1.1283791
    %v1710 = vmul.f32 %v1154, %v1709
    %v1711 = vmul.f32 %v1699, 3.8918573e-05
    %v1712 = vadd.f32 %v1711, 0.001143296
    %v1713 = vmul.f32 %v1699, %v1712
    %v1714 = vadd.f32 %v1713, 0.014752088
    %v1715 = vmul.f32 %v1699, %v1714
    %v1716 = vadd.f32 %v1715, 0.112945676
    %v1717 = vmul.f32 %v1699, %v1716
    %v1718 = vadd.f32 %v1717, 0.4994258
    %v1719 = vmul.f32 %v1699, %v1718
    %v1720 = vadd.f32 %v1719, 1.0
    %v1721 = vrcp.pop %v1720
    %v1722 = vmul.f32 %v1720, %v1721
    %v1723 = vsub.f32 1.0, %v1722
    %v1724 = vmul.f32 %v1721, %v1723
    %v1725 = vadd.f32 %v1721, %v1724
    %vm1726 = vweird.f32 %v1720
    %vm1727 = vweird.f32 %v1721
    %vm1728 = vmor %vm1726, %vm1727
    %v1729 = vsel %vm1728, %v1721, %v1725
    %v1730 = vand.u32 2147483647, %v1720
    %vm1731 = vcmp.eq.f32.partialorder %v1730, 8.507059e+37
    %v1732 = vand.u32 %v1720, 2147483648
    %v1733 = vor.u32 1.1754944e-38, %v1732
    %v1734 = vsel %vm1731, %v1733, %v1729
    %v1735 = vmul.f32 %v1710, %v1734
    %v1736 = vmin.f32 %v1735, 1.0
    %v1737 = vmax.f32 %v1736, -1.0
    %v1738 = vmul.f32 %v1157, %v1157
    %v1739 = vmin.f32 16.0, %v1738
    %v1740 = vmul.f32 %v1739, 2.1237322e-06
    %v1741 = vadd.f32 %v1740, 0.00028619796
    %v1742 = vmul.f32 %v1739, %v1741
    %v1743 = vadd.f32 %v1742, 0.0036580483
    %v1744 = vmul.f32 %v1739, %v1743
    %v1745 = vadd.f32 %v1744, 0.05243302
    %v1746 = vmul.f32 %v1739, %v1745
    %v1747 = vadd.f32 %v1746, 0.18741608
    %v1748 = vmul.f32 %v1739, %v1747
    %v1749 = vadd.f32 %v1748, 1.1283791
    %v1750 = vmul.f32 %v1157, %v1749
    %v1751 = vmul.f32 %v1739, 3.8918573e-05
    %v1752 = vadd.f32 %v1751, 0.001143296
    %v1753 = vmul.f32 %v1739, %v1752
    %v1754 = vadd.f32 %v1753, 0.014752088
    %v1755 = vmul.f32 %v1739, %v1754
    %v1756 = vadd.f32 %v1755, 0.112945676
    %v1757 = vmul.f32 %v1739, %v1756
    %v1758 = vadd.f32 %v1757, 0.4994258
    %v1759 = vmul.f32 %v1739, %v1758
    %v1760 = vadd.f32 %v1759, 1.0
    %v1761 = vrcp.pop %v1760
    %v1762 = vmul.f32 %v1760, %v1761
    %v1763 = vsub.f32 1.0, %v1762
    %v1764 = vmul.f32 %v1761, %v1763
    %v1765 = vadd.f32 %v1761, %v1764
    %vm1766 = vweird.f32 %v1760
    %vm1767 = vweird.f32 %v1761
    %vm1768 = vmor %vm1766, %vm1767
    %v1769 = vsel %vm1768, %v1761, %v1765
    %v1770 = vand.u32 2147483647, %v1760
    %vm1771 = vcmp.eq.f32.partialorder %v1770, 8.507059e+37
    %v1772 = vand.u32 %v1760, 2147483648
    %v1773 = vor.u32 1.1754944e-38, %v1772
    %v1774 = vsel %vm1771, %v1773, %v1769
    %v1775 = vmul.f32 %v1750, %v1774
    %v1776 = vmin.f32 %v1775, 1.0
    %v1777 = vmax.f32 %v1776, -1.0
    %v1778 = vmul.f32 %v1160, %v1160
    %v1779 = vmin.f32 16.0, %v1778
    %v1780 = vmul.f32 %v1779, 2.1237322e-06
    %v1781 = vadd.f32 %v1780, 0.00028619796
    %v1782 = vmul.f32 %v1779, %v1781
    %v1783 = vadd.f32 %v1782, 0.0036580483
    %v1784 = vmul.f32 %v1779, %v1783
    %v1785 = vadd.f32 %v1784, 0.05243302
    %v1786 = vmul.f32 %v1779, %v1785
    %v1787 = vadd.f32 %v1786, 0.18741608
    %v1788 = vmul.f32 %v1779, %v1787
    %v1789 = vadd.f32 %v1788, 1.1283791
    %v1790 = vmul.f32 %v1160, %v1789
    %v1791 = vmul.f32 %v1779, 3.8918573e-05
    %v1792 = vadd.f32 %v1791, 0.001143296
    %v1793 = vmul.f32 %v1779, %v1792
    %v1794 = vadd.f32 %v1793, 0.014752088
    %v1795 = vmul.f32 %v1779, %v1794
    %v1796 = vadd.f32 %v1795, 0.112945676
    %v1797 = vmul.f32 %v1779, %v1796
    %v1798 = vadd.f32 %v1797, 0.4994258
    %v1799 = vmul.f32 %v1779, %v1798
    %v1800 = vadd.f32 %v1799, 1.0
    %v1801 = vrcp.pop %v1800
    %v1802 = vmul.f32 %v1800, %v1801
    %v1803 = vsub.f32 1.0, %v1802
    %v1804 = vmul.f32 %v1801, %v1803
    %v1805 = vadd.f32 %v1801, %v1804
    %vm1806 = vweird.f32 %v1800
    %vm1807 = vweird.f32 %v1801
    %vm1808 = vmor %vm1806, %vm1807
    %v1809 = vsel %vm1808, %v1801, %v1805
    %v1810 = vand.u32 2147483647, %v1800
    %vm1811 = vcmp.eq.f32.partialorder %v1810, 8.507059e+37
    %v1812 = vand.u32 %v1800, 2147483648
    %v1813 = vor.u32 1.1754944e-38, %v1812
    %v1814 = vsel %vm1811, %v1813, %v1809
    %v1815 = vmul.f32 %v1790, %v1814
    %v1816 = vmin.f32 %v1815, 1.0
    %v1817 = vmax.f32 %v1816, -1.0
    %v1818 = vadd.f32 %v1217, 1.0
    %v1819 = vadd.f32 %v1257, 1.0
    %v1820 = vadd.f32 %v1297, 1.0
    %v1821 = vadd.f32 %v1337, 1.0
    %v1822 = vadd.f32 %v1377, 1.0
    %v1823 = vadd.f32 %v1417, 1.0
    %v1824 = vadd.f32 %v1457, 1.0
    %v1825 = vadd.f32 %v1497, 1.0
    %v1826 = vadd.f32 %v1537, 1.0
    %v1827 = vadd.f32 %v1577, 1.0
    %v1828 = vadd.f32 %v1617, 1.0
    %v1829 = vadd.f32 %v1657, 1.0
    %v1830 = vadd.f32 %v1697, 1.0
    %v1831 = vadd.f32 %v1737, 1.0
    %v1832 = vadd.f32 %v1777, 1.0
    %v1833 = vadd.f32 %v1817, 1.0
    %v1834 = vmul.f32 %v1162, %v1818
    %v1835 = vmul.f32 %v1163, %v1819
    %v1836 = vmul.f32 %v1164, %v1820
    %v1837 = vmul.f32 %v1165, %v1821
    %v1838 = vmul.f32 %v1166, %v1822
    %v1839 = vmul.f32 %v1167, %v1823
    %v1840 = vmul.f32 %v1168, %v1824
    %v1841 = vmul.f32 %v1169, %v1825
    %v1842 = vmul.f32 %v1170, %v1826
    %v1843 = vmul.f32 %v1171, %v1827
    %v1844 = vmul.f32 %v1172, %v1828
    %v1845 = vmul.f32 %v1173, %v1829
    %v1846 = vmul.f32 %v1174, %v1830
    %v1847 = vmul.f32 %v1175, %v1831
    %v1848 = vmul.f32 %v1176, %v1832
    %v1849 = vmul.f32 %v1177, %v1833
    %vm1850 = vcmask 785408
    %1851 = vst.msk [vmem:[#allocation2] sm:$0xff] %vm1850, %v1834
    %1852 = vst.msk [vmem:[#allocation2 + $0x8] sm:$0xff] %vm1850, %v1835
    %1853 = vst.msk [vmem:[#allocation2 + $0x10] sm:$0xff] %vm1850, %v1836
    %1854 = vst.msk [vmem:[#allocation2 + $0x18] sm:$0xff] %vm1850, %v1837
    %1855 = vst.msk [vmem:[#allocation2 + $0x20] sm:$0xff] %vm1850, %v1838
    %1856 = vst.msk [vmem:[#allocation2 + $0x28] sm:$0xff] %vm1850, %v1839
    %1857 = vst.msk [vmem:[#allocation2 + $0x30] sm:$0xff] %vm1850, %v1840
    %1858 = vst.msk [vmem:[#allocation2 + $0x38] sm:$0xff] %vm1850, %v1841
    %1859 = vst.msk [vmem:[#allocation2 + $0x40] sm:$0xff] %vm1850, %v1842
    %1860 = vst.msk [vmem:[#allocation2 + $0x48] sm:$0xff] %vm1850, %v1843
    %1861 = vst.msk [vmem:[#allocation2 + $0x50] sm:$0xff] %vm1850, %v1844
    %1862 = vst.msk [vmem:[#allocation2 + $0x58] sm:$0xff] %vm1850, %v1845
    %1863 = vst.msk [vmem:[#allocation2 + $0x60] sm:$0xff] %vm1850, %v1846
    %1864 = vst.msk [vmem:[#allocation2 + $0x68] sm:$0xff] %vm1850, %v1847
    %1865 = vst.msk [vmem:[#allocation2 + $0x70] sm:$0xff] %vm1850, %v1848
    %1866 = vst.msk [vmem:[#allocation2 + $0x78] sm:$0xff] %vm1850, %v1849
    // Predicated region
    $region30: #{branch_forward.1} parent=1 // pred_check
      _
    $region31: #{branch_forward.1} parent=1 // pred_check_branch
      %1868 = sbr.rel (0) target = $region33
    $region32: #{branch_forward.1} parent=1 // pred_region
      %1870 = vsyncadd [#allocation3], 1792
      %s1871 = sshll.u32 [#allocation2], 4
      %s1872 = int_to_ptr.vmem [resolvable:$true] %s1871
      %s1873 = sshll.u32 %s7, 4
      %s1874 = int_to_ptr.hbm [resolvable:$true] %s1873
      %1879 = dma.vmem_to_hbm [thread:$0]  %s1872, 256, %s1874, [#allocation3], 128, 128, 8
    $region33: #{branch_forward.1} parent=1 // pred_fallthru
      _
    // Predicated region
    $region34: #{branch_forward.1} parent=1 // pred_check
      _
    $region35: #{branch_forward.1} parent=1 // pred_check_branch
      %1881 = sbr.rel (0) target = $region37
    $region36: #{branch_forward.1} parent=1 // pred_region
      %1883 = dma.done [#allocation3], 2048
    $region37: #{branch_forward.1} parent=1 // pred_fallthru
      _
    %1884 = vsyncpa [#allocation3], 1

</llo_original>
